<compile_context>
chip_gen: v6e
topology: v6e:2x2x1
jax: 0.10.0
libtpu: 0.0.40
codegen_flags: <defaults>
</compile_context>

<pallas_src>
import functools

import jax
import jax.numpy as jnp
from jax import lax
from jax.experimental import pallas as pl
from jax.experimental.pallas import tpu as pltpu


_TM = 1024                       # row tile for pointwise-conv matmuls (512-1024 sweet spot)
_MIN_PALLAS_ROWS = 8             # below this launch overhead dominates -> plain jnp.dot
_HEAD_PAD = 128                  # fc output padded to a full 128-lane register
_VMEM_LIMIT = 32 * 1024 * 1024   # comfortably within scoped VMEM on v5e/v6e/v7x


# -----------------------------------------------------------------------------
# Pallas kernels
# -----------------------------------------------------------------------------
def _matmul_bias_kernel(relu, x_ref, w_ref, b_ref, o_ref):
    # (TM, K) @ (K, N) on the MXU: bf16 operands, f32 accumulation.
    acc = jnp.dot(x_ref[...], w_ref[...], preferred_element_type=jnp.float32)
    acc = acc + b_ref[...]            # f32 epilogue (bias + ReLU); v5e has no bf16 VPU
    if relu:
        acc = jnp.maximum(acc, 0.0)
    o_ref[...] = acc.astype(o_ref.dtype)


def matmul_bias_act(x, w, b, relu=False):
    """(M, K) @ (K, N) + b (+ReLU).  x/w bf16, b f32 of shape (1, N).

    Tiled over M so BlockSpec double-buffers the row tiles; the M axis is
    "parallel" so v7x can shard rows across its two TensorCores.  The (K, N)
    weight and the bias use constant index_maps, so they stay resident in VMEM
    across the whole grid (no re-DMA).
    """
    M, K = x.shape
    N = w.shape[1]
    if M < _MIN_PALLAS_ROWS:
        # Degenerate row counts: the MXU tile would be mostly sublane padding
        # and per-call overhead dominates -> let XLA fuse the tiny GEMM.
        acc = jnp.dot(x, w, preferred_element_type=jnp.float32) + b
        if relu:
            acc = jnp.maximum(acc, 0.0)
        return acc.astype(x.dtype)

    tm = min(_TM, M)                  # full-array block when M <= TM (always legal)
    grid_m = pl.cdiv(M, tm)
    return pl.pallas_call(
        functools.partial(_matmul_bias_kernel, relu),
        out_shape=jax.ShapeDtypeStruct((M, N), x.dtype),
        grid=(grid_m,),
        in_specs=[
            pl.BlockSpec((tm, K), lambda i: (i, 0)),
            pl.BlockSpec((K, N), lambda i: (0, 0)),    # weight resident across grid
            pl.BlockSpec((1, N), lambda i: (0, 0)),    # bias resident across grid
        ],
        out_specs=pl.BlockSpec((tm, N), lambda i: (i, 0)),
        compiler_params=pltpu.CompilerParams(
            dimension_semantics=("parallel",),
            vmem_limit_bytes=_VMEM_LIMIT),
    )(x, w, b)


def _head_kernel(x_ref, w5_ref, b5_ref, wfc_ref, bfc_ref, o_ref):
    # One batch sample per grid step:
    #   conv5 (1x1, 192->1024) + folded-BN + ReLU -> global average pool -> fc.
    x = x_ref[0]                                                   # (HW, C) bf16
    h = jnp.dot(x, w5_ref[...], preferred_element_type=jnp.float32)
    h = jnp.maximum(h + b5_ref[...], 0.0)                          # (HW, 1024) f32
    pooled = jnp.mean(h, axis=0, keepdims=True)                    # (1, 1024) f32 pool
    logits = jnp.dot(pooled, wfc_ref[...],
                     preferred_element_type=jnp.float32) + bfc_ref[...]
    o_ref[...] = logits.reshape(1, 1, -1).astype(o_ref.dtype)      # (1, 1, 128)


def head_pool_fc(y, w5, b5, wfc, bfc, num_classes):
    """Fused conv5 + global-average-pool + fc.

    Avoids materializing the (N, H, W, 1024) conv5 activation in HBM and the
    extra kernel launch; the fc output is lane-padded to 128 for a dense store
    and sliced back to num_classes in the wrapper.
    """
    N, H, W, C = y.shape
    c5 = w5.shape[1]
    x3 = y.reshape(N, H * W, C)
    out = pl.pallas_call(
        _head_kernel,
        out_shape=jax.ShapeDtypeStruct((N, 1, _HEAD_PAD), jnp.float32),
        grid=(N,),
        in_specs=[
            pl.BlockSpec((1, H * W, C), lambda b: (b, 0, 0)),
            pl.BlockSpec((C, c5), lambda b: (0, 0)),
            pl.BlockSpec((1, c5), lambda b: (0, 0)),
            pl.BlockSpec((c5, _HEAD_PAD), lambda b: (0, 0)),
            pl.BlockSpec((1, _HEAD_PAD), lambda b: (0, 0)),
        ],
        out_specs=pl.BlockSpec((1, 1, _HEAD_PAD), lambda b: (b, 0, 0)),
        compiler_params=pltpu.CompilerParams(
            dimension_semantics=("parallel",),
            vmem_limit_bytes=_VMEM_LIMIT),
    )(x3, w5, b5, wfc, bfc)
    return out[:, 0, :num_classes]


# -----------------------------------------------------------------------------
# JAX glue (non-matmul pieces of ShuffleNetV2)
# -----------------------------------------------------------------------------
def pw_conv(x, w, b, relu=True):
    """1x1 conv + folded BN + optional ReLU via the Pallas matmul kernel."""
    N, H, W, C = x.shape
    out = matmul_bias_act(x.reshape(N * H * W, C), w, b, relu=relu)
    return out.reshape(N, H, W, w.shape[1])


def dw_conv(x, w, stride):
    """Depthwise 3x3 conv.  BN scale is pre-folded into w and the BN bias is
    folded into the following 1x1 conv's bias, so there is no epilogue here."""
    # TODO(synk): depthwise 3x3 spatial conv stays in lax (no clean
    # static-BlockSpec Pallas form for the shifted-window access pattern).
    C = x.shape[-1]
    y = lax.conv_general_dilated(
        x, w.reshape(3, 3, 1, C),
        window_strides=(stride, stride),
        padding=((1, 1), (1, 1)),
        dimension_numbers=("NHWC", "HWIO", "NHWC"),
        feature_group_count=C,
        preferred_element_type=jnp.float32,
    )
    return y.astype(x.dtype)


def interleave_channels(a, b):
    """channel_shuffle(concat([a, b], -1), groups=2) == channel-wise interleave,
    expressed as a single stack+reshape (no separate concat + transpose pass)."""
    # TODO(synk): this static permutation could be removed entirely by a global
    # channel-relabeling pass folded into adjacent 1x1 / depthwise weights; the
    # passthrough-branch bookkeeping across blocks is left for later.
    N, H, W, C = a.shape
    return jnp.stack([a, b], axis=-1).reshape(N, H, W, 2 * C)


def inverted_residual(x, p, stride):
    if stride == 1:
        C = x.shape[-1]
        x1, x2 = x[..., : C // 2], x[..., C // 2:]
        b2 = pw_conv(x2, p["b2_pw1_w"], p["b2_pw1_b"], relu=True)
        b2 = dw_conv(b2, p["b2_dw_w"], stride=1)
        b2 = pw_conv(b2, p["b2_pw2_w"], p["b2_pw2_b"], relu=True)
        return interleave_channels(x1, b2)
    b1 = dw_conv(x, p["b1_dw_w"], stride=stride)
    b1 = pw_conv(b1, p["b1_pw_w"], p["b1_pw_b"], relu=True)
    b2 = pw_conv(x, p["b2_pw1_w"], p["b2_pw1_b"], relu=True)
    b2 = dw_conv(b2, p["b2_dw_w"], stride=stride)
    b2 = pw_conv(b2, p["b2_pw2_w"], p["b2_pw2_b"], relu=True)
    return interleave_channels(b1, b2)


# -----------------------------------------------------------------------------
# Deterministic parameter initialization (synthetic, not a checkpoint load)
# -----------------------------------------------------------------------------
class ParamGen:
    def __init__(self, key):
        self.key = key

    def next(self, shape, scale=0.05):
        self.key, sub = jax.random.split(self.key)
        return scale * jax.random.normal(sub, shape, jnp.float32)


def init_bn(pg, c):
    gamma = 1.0 + pg.next((c,), 0.02)
    beta = pg.next((c,), 0.02)
    mean = pg.next((c,), 0.02)
    var = 1.0 + jnp.abs(pg.next((c,), 0.02))
    return (gamma, beta, mean, var)


def init_block(pg, cin, branch_features, stride):
    p = {}
    if stride > 1:
        p["b1_dw_w"] = pg.next((3, 3, cin))
        p["b1_bn1"] = init_bn(pg, cin)
        p["b1_pw_w"] = pg.next((cin, branch_features))
        p["b1_bn2"] = init_bn(pg, branch_features)
        pw1_in = cin
    else:
        pw1_in = cin // 2
    p["b2_pw1_w"] = pg.next((pw1_in, branch_features))
    p["b2_bn1"] = init_bn(pg, branch_features)
    p["b2_dw_w"] = pg.next((3, 3, branch_features))
    p["b2_bn2"] = init_bn(pg, branch_features)
    p["b2_pw2_w"] = pg.next((branch_features, branch_features))
    p["b2_bn3"] = init_bn(pg, branch_features)
    return p


def init_road_classifier(key, num_classes=3):
    # shufflenet_v2_x0_5: stage channels [24, 48, 96, 192, 1024], repeats [4, 8, 4]
    pg = ParamGen(key)
    params = {}
    params["conv1_w"] = pg.next((3, 3, 3, 24))      # HWIO
    params["conv1_bn"] = init_bn(pg, 24)
    cin = 24
    stages = []
    for repeats, cout in zip([4, 8, 4], [48, 96, 192]):
        bf = cout // 2
        blocks = [init_block(pg, cin, bf, stride=2)]
        for _ in range(repeats - 1):
            blocks.append(init_block(pg, cout, bf, stride=1))
        stages.append(blocks)
        cin = cout
    params["stages"] = stages
    params["conv5_w"] = pg.next((cin, 1024))
    params["conv5_bn"] = init_bn(pg, 1024)
    params["fc_w"] = pg.next((1024, num_classes))
    params["fc_b"] = pg.next((num_classes,))
    return params


# -----------------------------------------------------------------------------
# One-time inference param prep: BN folding, bias fusion, dtype casts, padding
# -----------------------------------------------------------------------------
def fold_bn(gamma, beta, mean, var, eps=1e-5):
    scale = gamma / jnp.sqrt(var + eps)
    bias = beta - mean * scale
    return scale, bias


def _prep_pw(w, bn, dw_bias=None):
    scale, bias = fold_bn(*bn)
    w_eff = w * scale[None, :]                 # fold BN scale into the 1x1 weights
    if dw_bias is not None:                    # fold the preceding depthwise-BN bias
        bias = bias + dw_bias @ w_eff
    return w_eff.astype(jnp.bfloat16), bias.reshape(1, -1).astype(jnp.float32)


def _prep_dw(w, bn):
    scale, bias = fold_bn(*bn)
    return (w * scale[None, None, :]).astype(jnp.bfloat16), bias.astype(jnp.float32)


def prepare_params(raw, num_classes=3):
    prep = {}
    s, b = fold_bn(*raw["conv1_bn"])
    prep["conv1_w"] = (raw["conv1_w"] * s[None, None, None, :]).astype(jnp.bfloat16)
    prep["conv1_b"] = b.astype(jnp.float32)

    stages = []
    for blocks in raw["stages"]:
        pblocks = []
        for p in blocks:
            q = {}
            if "b1_dw_w" in p:                 # stride-2 (downsample) block
                dw_w, dw_b = _prep_dw(p["b1_dw_w"], p["b1_bn1"])
                q["b1_dw_w"] = dw_w
                q["b1_pw_w"], q["b1_pw_b"] = _prep_pw(p["b1_pw_w"], p["b1_bn2"], dw_b)
            q["b2_pw1_w"], q["b2_pw1_b"] = _prep_pw(p["b2_pw1_w"], p["b2_bn1"])
            dw_w, dw_b = _prep_dw(p["b2_dw_w"], p["b2_bn2"])
            q["b2_dw_w"] = dw_w
            q["b2_pw2_w"], q["b2_pw2_b"] = _prep_pw(p["b2_pw2_w"], p["b2_bn3"], dw_b)
            pblocks.append(q)
        stages.append(pblocks)
    prep["stages"] = stages

    prep["conv5_w"], prep["conv5_b"] = _prep_pw(raw["conv5_w"], raw["conv5_bn"])
    pad = _HEAD_PAD - num_classes
    prep["fc_w"] = jnp.pad(raw["fc_w"], ((0, 0), (0, pad))).astype(jnp.float32)
    prep["fc_b"] = jnp.pad(raw["fc_b"], (0, pad)).reshape(1, -1).astype(jnp.float32)
    return prep


# -----------------------------------------------------------------------------
# Forward pass (eval-mode BN semantics, matching the torchvision forward)
# -----------------------------------------------------------------------------
def road_classifier_forward(params, x_nchw, num_classes=3):
    x = jnp.transpose(x_nchw, (0, 2, 3, 1)).astype(jnp.bfloat16)   # NCHW -> NHWC

    # Stem: conv 3x3 /2 (BN scale pre-folded into weights) + bias + ReLU.
    # TODO(synk): dense 3x3 stride-2 stem conv and the 3x3 maxpool stay in lax glue.
    y = lax.conv_general_dilated(
        x, params["conv1_w"], (2, 2), ((1, 1), (1, 1)),
        dimension_numbers=("NHWC", "HWIO", "NHWC"),
        preferred_element_type=jnp.float32)
    y = jnp.maximum(y + params["conv1_b"], 0.0).astype(jnp.bfloat16)

    # MaxPool 3x3 /2, pad 1
    y = lax.reduce_window(
        y, jnp.array(-jnp.inf, y.dtype), lax.max,
        (1, 3, 3, 1), (1, 2, 2, 1),
        ((0, 0), (1, 1), (1, 1), (0, 0)))

    # Stages 2-4
    for blocks in params["stages"]:
        y = inverted_residual(y, blocks[0], stride=2)
        for p in blocks[1:]:
            y = inverted_residual(y, p, stride=1)

    # Fused tail: conv5 (1x1 + BN + ReLU) + global avg pool + fc -> (N, num_classes)
    return head_pool_fc(y, params["conv5_w"], params["conv5_b"],
                        params["fc_w"], params["fc_b"], num_classes)


# -----------------------------------------------------------------------------
if __name__ == "__main__":
    key = jax.random.PRNGKey(0)
    pkey, xkey = jax.random.split(key)

    raw_params = init_road_classifier(pkey, num_classes=3)
    params = prepare_params(raw_params, num_classes=3)   # one-time fold/cast/pad

    # Small NCHW input (ImageNet-style 3 channels; 32x32 so the /32 backbone
    # still produces a valid 1x1 feature map before global pooling).
    x = jax.random.normal(xkey, (2, 3, 32, 32), jnp.float32)

    fwd = jax.jit(road_classifier_forward)
    logits = fwd(params, x)
    jax.block_until_ready(logits)

    assert logits.shape == (2, 3), logits.shape
    assert jnp.all(jnp.isfinite(logits))
    print("KERNEL_OK")
</pallas_src>

<mosaic_0001>
module attributes {stable_mosaic.version = 11 : i64} {
  func.func @_matmul_bias_kernel(%arg0: i32, %arg1: memref<128x24xbf16, #tpu.memory_space<vmem>>, %arg2: memref<24x24xbf16, #tpu.memory_space<vmem>>, %arg3: memref<1x24xf32, #tpu.memory_space<vmem>>, %arg4: memref<128x24xbf16, #tpu.memory_space<vmem>>) attributes {dimension_semantics = [#tpu.dimension_semantics<parallel>], iteration_bounds = array<i64: 1>, scalar_prefetch = 0 : i64, scratch_operands = 0 : i64, tpu.core_type = #tpu.core_type<tc>, window_params = [{transform_indices = @transform_0, window_bounds = array<i64: 128, 24>}, {pipeline_mode = #tpu.pipeline_mode<synchronous>, transform_indices = @transform_1, window_bounds = array<i64: 24, 24>}, {pipeline_mode = #tpu.pipeline_mode<synchronous>, transform_indices = @transform_2, window_bounds = array<i64: 1, 24>}, {transform_indices = @transform_3, window_bounds = array<i64: 128, 24>}]} {
    %c0 = arith.constant 0 : index
    %c0_0 = arith.constant 0 : index
    %0 = vector.load %arg1[%c0, %c0_0] : memref<128x24xbf16, #tpu.memory_space<vmem>>, vector<128x24xbf16>
    %c0_1 = arith.constant 0 : index
    %c0_2 = arith.constant 0 : index
    %1 = vector.load %arg2[%c0_1, %c0_2] : memref<24x24xbf16, #tpu.memory_space<vmem>>, vector<24x24xbf16>
    %cst = arith.constant dense<0.000000e+00> : vector<128x24xf32>
    %2 = tpu.matmul %0, %1, %cst {dimension_numbers = #tpu.dot_dimension_numbers<[1], [0], [0], [1], [0, 0, 1, 1], [], []>} : vector<128x24xbf16>, vector<24x24xbf16>, vector<128x24xf32> -> vector<128x24xf32>
    %c0_3 = arith.constant 0 : index
    %c0_4 = arith.constant 0 : index
    %3 = vector.load %arg3[%c0_3, %c0_4] : memref<1x24xf32, #tpu.memory_space<vmem>>, vector<1x24xf32>
    %4 = vector.broadcast %3 : vector<1x24xf32> to vector<128x24xf32>
    %5 = arith.addf %2, %4 : vector<128x24xf32>
    %cst_5 = arith.constant 0.000000e+00 : f32
    %6 = vector.broadcast %cst_5 : f32 to vector<128x24xf32>
    %7 = arith.maximumf %5, %6 : vector<128x24xf32>
    %8 = arith.truncf %7 : vector<128x24xf32> to vector<128x24xbf16>
    %c0_6 = arith.constant 0 : index
    %c0_7 = arith.constant 0 : index
    %9 = vector.load %arg4[%c0_6, %c0_7] : memref<128x24xbf16, #tpu.memory_space<vmem>>, vector<128x24xbf16>
    tpu.vector_store %arg4[%c0_6, %c0_7], %8 {strides = array<i32>} : memref<128x24xbf16, #tpu.memory_space<vmem>>, vector<128x24xbf16>,
    return
  }
  func.func @transform_0(%arg0: i32) -> (i32, i32) {
    %c0_i32 = arith.constant 0 : i32
    %c0_i32_0 = arith.constant 0 : i32
    return %arg0, %c0_i32 : i32, i32
  }
  func.func @transform_1(%arg0: i32) -> (i32, i32) {
    %c0_i32 = arith.constant 0 : i32
    %c0_i32_0 = arith.constant 0 : i32
    %c0_i32_1 = arith.constant 0 : i32
    return %c0_i32, %c0_i32_0 : i32, i32
  }
  func.func @transform_2(%arg0: i32) -> (i32, i32) {
    %c0_i32 = arith.constant 0 : i32
    %c0_i32_0 = arith.constant 0 : i32
    %c0_i32_1 = arith.constant 0 : i32
    return %c0_i32, %c0_i32_0 : i32, i32
  }
  func.func @transform_3(%arg0: i32) -> (i32, i32) {
    %c0_i32 = arith.constant 0 : i32
    %c0_i32_0 = arith.constant 0 : i32
    return %arg0, %c0_i32 : i32, i32
  }
}

module attributes {stable_mosaic.version = 11 : i64} {
  func.func @_matmul_bias_kernel(%arg0: i32, %arg1: memref<32x24xbf16, #tpu.memory_space<vmem>>, %arg2: memref<24x24xbf16, #tpu.memory_space<vmem>>, %arg3: memref<1x24xf32, #tpu.memory_space<vmem>>, %arg4: memref<32x24xbf16, #tpu.memory_space<vmem>>) attributes {dimension_semantics = [#tpu.dimension_semantics<parallel>], iteration_bounds = array<i64: 1>, scalar_prefetch = 0 : i64, scratch_operands = 0 : i64, tpu.core_type = #tpu.core_type<tc>, window_params = [{transform_indices = @transform_0, window_bounds = array<i64: 32, 24>}, {pipeline_mode = #tpu.pipeline_mode<synchronous>, transform_indices = @transform_1, window_bounds = array<i64: 24, 24>}, {pipeline_mode = #tpu.pipeline_mode<synchronous>, transform_indices = @transform_2, window_bounds = array<i64: 1, 24>}, {transform_indices = @transform_3, window_bounds = array<i64: 32, 24>}]} {
    %c0 = arith.constant 0 : index
    %c0_0 = arith.constant 0 : index
    %0 = vector.load %arg1[%c0, %c0_0] : memref<32x24xbf16, #tpu.memory_space<vmem>>, vector<32x24xbf16>
    %c0_1 = arith.constant 0 : index
    %c0_2 = arith.constant 0 : index
    %1 = vector.load %arg2[%c0_1, %c0_2] : memref<24x24xbf16, #tpu.memory_space<vmem>>, vector<24x24xbf16>
    %cst = arith.constant dense<0.000000e+00> : vector<32x24xf32>
    %2 = tpu.matmul %0, %1, %cst {dimension_numbers = #tpu.dot_dimension_numbers<[1], [0], [0], [1], [0, 0, 1, 1], [], []>} : vector<32x24xbf16>, vector<24x24xbf16>, vector<32x24xf32> -> vector<32x24xf32>
    %c0_3 = arith.constant 0 : index
    %c0_4 = arith.constant 0 : index
    %3 = vector.load %arg3[%c0_3, %c0_4] : memref<1x24xf32, #tpu.memory_space<vmem>>, vector<1x24xf32>
    %4 = vector.broadcast %3 : vector<1x24xf32> to vector<32x24xf32>
    %5 = arith.addf %2, %4 : vector<32x24xf32>
    %cst_5 = arith.constant 0.000000e+00 : f32
    %6 = vector.broadcast %cst_5 : f32 to vector<32x24xf32>
    %7 = arith.maximumf %5, %6 : vector<32x24xf32>
    %8 = arith.truncf %7 : vector<32x24xf32> to vector<32x24xbf16>
    %c0_6 = arith.constant 0 : index
    %c0_7 = arith.constant 0 : index
    %9 = vector.load %arg4[%c0_6, %c0_7] : memref<32x24xbf16, #tpu.memory_space<vmem>>, vector<32x24xbf16>
    tpu.vector_store %arg4[%c0_6, %c0_7], %8 {strides = array<i32>} : memref<32x24xbf16, #tpu.memory_space<vmem>>, vector<32x24xbf16>,
    return
  }
  func.func @transform_0(%arg0: i32) -> (i32, i32) {
    %c0_i32 = arith.constant 0 : i32
    %c0_i32_0 = arith.constant 0 : i32
    return %arg0, %c0_i32 : i32, i32
  }
  func.func @transform_1(%arg0: i32) -> (i32, i32) {
    %c0_i32 = arith.constant 0 : i32
    %c0_i32_0 = arith.constant 0 : i32
    %c0_i32_1 = arith.constant 0 : i32
    return %c0_i32, %c0_i32_0 : i32, i32
  }
  func.func @transform_2(%arg0: i32) -> (i32, i32) {
    %c0_i32 = arith.constant 0 : i32
    %c0_i32_0 = arith.constant 0 : i32
    %c0_i32_1 = arith.constant 0 : i32
    return %c0_i32, %c0_i32_0 : i32, i32
  }
  func.func @transform_3(%arg0: i32) -> (i32, i32) {
    %c0_i32 = arith.constant 0 : i32
    %c0_i32_0 = arith.constant 0 : i32
    return %arg0, %c0_i32 : i32, i32
  }
}

module attributes {stable_mosaic.version = 11 : i64} {
  func.func @_matmul_bias_kernel(%arg0: i32, %arg1: memref<32x48xbf16, #tpu.memory_space<vmem>>, %arg2: memref<48x48xbf16, #tpu.memory_space<vmem>>, %arg3: memref<1x48xf32, #tpu.memory_space<vmem>>, %arg4: memref<32x48xbf16, #tpu.memory_space<vmem>>) attributes {dimension_semantics = [#tpu.dimension_semantics<parallel>], iteration_bounds = array<i64: 1>, scalar_prefetch = 0 : i64, scratch_operands = 0 : i64, tpu.core_type = #tpu.core_type<tc>, window_params = [{transform_indices = @transform_0, window_bounds = array<i64: 32, 48>}, {pipeline_mode = #tpu.pipeline_mode<synchronous>, transform_indices = @transform_1, window_bounds = array<i64: 48, 48>}, {pipeline_mode = #tpu.pipeline_mode<synchronous>, transform_indices = @transform_2, window_bounds = array<i64: 1, 48>}, {transform_indices = @transform_3, window_bounds = array<i64: 32, 48>}]} {
    %c0 = arith.constant 0 : index
    %c0_0 = arith.constant 0 : index
    %0 = vector.load %arg1[%c0, %c0_0] : memref<32x48xbf16, #tpu.memory_space<vmem>>, vector<32x48xbf16>
    %c0_1 = arith.constant 0 : index
    %c0_2 = arith.constant 0 : index
    %1 = vector.load %arg2[%c0_1, %c0_2] : memref<48x48xbf16, #tpu.memory_space<vmem>>, vector<48x48xbf16>
    %cst = arith.constant dense<0.000000e+00> : vector<32x48xf32>
    %2 = tpu.matmul %0, %1, %cst {dimension_numbers = #tpu.dot_dimension_numbers<[1], [0], [0], [1], [0, 0, 1, 1], [], []>} : vector<32x48xbf16>, vector<48x48xbf16>, vector<32x48xf32> -> vector<32x48xf32>
    %c0_3 = arith.constant 0 : index
    %c0_4 = arith.constant 0 : index
    %3 = vector.load %arg3[%c0_3, %c0_4] : memref<1x48xf32, #tpu.memory_space<vmem>>, vector<1x48xf32>
    %4 = vector.broadcast %3 : vector<1x48xf32> to vector<32x48xf32>
    %5 = arith.addf %2, %4 : vector<32x48xf32>
    %cst_5 = arith.constant 0.000000e+00 : f32
    %6 = vector.broadcast %cst_5 : f32 to vector<32x48xf32>
    %7 = arith.maximumf %5, %6 : vector<32x48xf32>
    %8 = arith.truncf %7 : vector<32x48xf32> to vector<32x48xbf16>
    %c0_6 = arith.constant 0 : index
    %c0_7 = arith.constant 0 : index
    %9 = vector.load %arg4[%c0_6, %c0_7] : memref<32x48xbf16, #tpu.memory_space<vmem>>, vector<32x48xbf16>
    tpu.vector_store %arg4[%c0_6, %c0_7], %8 {strides = array<i32>} : memref<32x48xbf16, #tpu.memory_space<vmem>>, vector<32x48xbf16>,
    return
  }
  func.func @transform_0(%arg0: i32) -> (i32, i32) {
    %c0_i32 = arith.constant 0 : i32
    %c0_i32_0 = arith.constant 0 : i32
    return %arg0, %c0_i32 : i32, i32
  }
  func.func @transform_1(%arg0: i32) -> (i32, i32) {
    %c0_i32 = arith.constant 0 : i32
    %c0_i32_0 = arith.constant 0 : i32
    %c0_i32_1 = arith.constant 0 : i32
    return %c0_i32, %c0_i32_0 : i32, i32
  }
  func.func @transform_2(%arg0: i32) -> (i32, i32) {
    %c0_i32 = arith.constant 0 : i32
    %c0_i32_0 = arith.constant 0 : i32
    %c0_i32_1 = arith.constant 0 : i32
    return %c0_i32, %c0_i32_0 : i32, i32
  }
  func.func @transform_3(%arg0: i32) -> (i32, i32) {
    %c0_i32 = arith.constant 0 : i32
    %c0_i32_0 = arith.constant 0 : i32
    return %arg0, %c0_i32 : i32, i32
  }
}

module attributes {stable_mosaic.version = 11 : i64} {
  func.func @_matmul_bias_kernel(%arg0: i32, %arg1: memref<8x48xbf16, #tpu.memory_space<vmem>>, %arg2: memref<48x48xbf16, #tpu.memory_space<vmem>>, %arg3: memref<1x48xf32, #tpu.memory_space<vmem>>, %arg4: memref<8x48xbf16, #tpu.memory_space<vmem>>) attributes {dimension_semantics = [#tpu.dimension_semantics<parallel>], iteration_bounds = array<i64: 1>, scalar_prefetch = 0 : i64, scratch_operands = 0 : i64, tpu.core_type = #tpu.core_type<tc>, window_params = [{transform_indices = @transform_0, window_bounds = array<i64: 8, 48>}, {pipeline_mode = #tpu.pipeline_mode<synchronous>, transform_indices = @transform_1, window_bounds = array<i64: 48, 48>}, {pipeline_mode = #tpu.pipeline_mode<synchronous>, transform_indices = @transform_2, window_bounds = array<i64: 1, 48>}, {transform_indices = @transform_3, window_bounds = array<i64: 8, 48>}]} {
    %c0 = arith.constant 0 : index
    %c0_0 = arith.constant 0 : index
    %0 = vector.load %arg1[%c0, %c0_0] : memref<8x48xbf16, #tpu.memory_space<vmem>>, vector<8x48xbf16>
    %c0_1 = arith.constant 0 : index
    %c0_2 = arith.constant 0 : index
    %1 = vector.load %arg2[%c0_1, %c0_2] : memref<48x48xbf16, #tpu.memory_space<vmem>>, vector<48x48xbf16>
    %cst = arith.constant dense<0.000000e+00> : vector<8x48xf32>
    %2 = tpu.matmul %0, %1, %cst {dimension_numbers = #tpu.dot_dimension_numbers<[1], [0], [0], [1], [0, 0, 1, 1], [], []>} : vector<8x48xbf16>, vector<48x48xbf16>, vector<8x48xf32> -> vector<8x48xf32>
    %c0_3 = arith.constant 0 : index
    %c0_4 = arith.constant 0 : index
    %3 = vector.load %arg3[%c0_3, %c0_4] : memref<1x48xf32, #tpu.memory_space<vmem>>, vector<1x48xf32>
    %4 = vector.broadcast %3 : vector<1x48xf32> to vector<8x48xf32>
    %5 = arith.addf %2, %4 : vector<8x48xf32>
    %cst_5 = arith.constant 0.000000e+00 : f32
    %6 = vector.broadcast %cst_5 : f32 to vector<8x48xf32>
    %7 = arith.maximumf %5, %6 : vector<8x48xf32>
    %8 = arith.truncf %7 : vector<8x48xf32> to vector<8x48xbf16>
    %c0_6 = arith.constant 0 : index
    %c0_7 = arith.constant 0 : index
    %9 = vector.load %arg4[%c0_6, %c0_7] : memref<8x48xbf16, #tpu.memory_space<vmem>>, vector<8x48xbf16>
    tpu.vector_store %arg4[%c0_6, %c0_7], %8 {strides = array<i32>} : memref<8x48xbf16, #tpu.memory_space<vmem>>, vector<8x48xbf16>,
    return
  }
  func.func @transform_0(%arg0: i32) -> (i32, i32) {
    %c0_i32 = arith.constant 0 : i32
    %c0_i32_0 = arith.constant 0 : i32
    return %arg0, %c0_i32 : i32, i32
  }
  func.func @transform_1(%arg0: i32) -> (i32, i32) {
    %c0_i32 = arith.constant 0 : i32
    %c0_i32_0 = arith.constant 0 : i32
    %c0_i32_1 = arith.constant 0 : i32
    return %c0_i32, %c0_i32_0 : i32, i32
  }
  func.func @transform_2(%arg0: i32) -> (i32, i32) {
    %c0_i32 = arith.constant 0 : i32
    %c0_i32_0 = arith.constant 0 : i32
    %c0_i32_1 = arith.constant 0 : i32
    return %c0_i32, %c0_i32_0 : i32, i32
  }
  func.func @transform_3(%arg0: i32) -> (i32, i32) {
    %c0_i32 = arith.constant 0 : i32
    %c0_i32_0 = arith.constant 0 : i32
    return %arg0, %c0_i32 : i32, i32
  }
}

module attributes {stable_mosaic.version = 11 : i64} {
  func.func @_matmul_bias_kernel(%arg0: i32, %arg1: memref<8x96xbf16, #tpu.memory_space<vmem>>, %arg2: memref<96x96xbf16, #tpu.memory_space<vmem>>, %arg3: memref<1x96xf32, #tpu.memory_space<vmem>>, %arg4: memref<8x96xbf16, #tpu.memory_space<vmem>>) attributes {dimension_semantics = [#tpu.dimension_semantics<parallel>], iteration_bounds = array<i64: 1>, scalar_prefetch = 0 : i64, scratch_operands = 0 : i64, tpu.core_type = #tpu.core_type<tc>, window_params = [{transform_indices = @transform_0, window_bounds = array<i64: 8, 96>}, {pipeline_mode = #tpu.pipeline_mode<synchronous>, transform_indices = @transform_1, window_bounds = array<i64: 96, 96>}, {pipeline_mode = #tpu.pipeline_mode<synchronous>, transform_indices = @transform_2, window_bounds = array<i64: 1, 96>}, {transform_indices = @transform_3, window_bounds = array<i64: 8, 96>}]} {
    %c0 = arith.constant 0 : index
    %c0_0 = arith.constant 0 : index
    %0 = vector.load %arg1[%c0, %c0_0] : memref<8x96xbf16, #tpu.memory_space<vmem>>, vector<8x96xbf16>
    %c0_1 = arith.constant 0 : index
    %c0_2 = arith.constant 0 : index
    %1 = vector.load %arg2[%c0_1, %c0_2] : memref<96x96xbf16, #tpu.memory_space<vmem>>, vector<96x96xbf16>
    %cst = arith.constant dense<0.000000e+00> : vector<8x96xf32>
    %2 = tpu.matmul %0, %1, %cst {dimension_numbers = #tpu.dot_dimension_numbers<[1], [0], [0], [1], [0, 0, 1, 1], [], []>} : vector<8x96xbf16>, vector<96x96xbf16>, vector<8x96xf32> -> vector<8x96xf32>
    %c0_3 = arith.constant 0 : index
    %c0_4 = arith.constant 0 : index
    %3 = vector.load %arg3[%c0_3, %c0_4] : memref<1x96xf32, #tpu.memory_space<vmem>>, vector<1x96xf32>
    %4 = vector.broadcast %3 : vector<1x96xf32> to vector<8x96xf32>
    %5 = arith.addf %2, %4 : vector<8x96xf32>
    %cst_5 = arith.constant 0.000000e+00 : f32
    %6 = vector.broadcast %cst_5 : f32 to vector<8x96xf32>
    %7 = arith.maximumf %5, %6 : vector<8x96xf32>
    %8 = arith.truncf %7 : vector<8x96xf32> to vector<8x96xbf16>
    %c0_6 = arith.constant 0 : index
    %c0_7 = arith.constant 0 : index
    %9 = vector.load %arg4[%c0_6, %c0_7] : memref<8x96xbf16, #tpu.memory_space<vmem>>, vector<8x96xbf16>
    tpu.vector_store %arg4[%c0_6, %c0_7], %8 {strides = array<i32>} : memref<8x96xbf16, #tpu.memory_space<vmem>>, vector<8x96xbf16>,
    return
  }
  func.func @transform_0(%arg0: i32) -> (i32, i32) {
    %c0_i32 = arith.constant 0 : i32
    %c0_i32_0 = arith.constant 0 : i32
    return %arg0, %c0_i32 : i32, i32
  }
  func.func @transform_1(%arg0: i32) -> (i32, i32) {
    %c0_i32 = arith.constant 0 : i32
    %c0_i32_0 = arith.constant 0 : i32
    %c0_i32_1 = arith.constant 0 : i32
    return %c0_i32, %c0_i32_0 : i32, i32
  }
  func.func @transform_2(%arg0: i32) -> (i32, i32) {
    %c0_i32 = arith.constant 0 : i32
    %c0_i32_0 = arith.constant 0 : i32
    %c0_i32_1 = arith.constant 0 : i32
    return %c0_i32, %c0_i32_0 : i32, i32
  }
  func.func @transform_3(%arg0: i32) -> (i32, i32) {
    %c0_i32 = arith.constant 0 : i32
    %c0_i32_0 = arith.constant 0 : i32
    return %arg0, %c0_i32 : i32, i32
  }
}

module attributes {stable_mosaic.version = 11 : i64} {
  func.func @_head_kernel(%arg0: i32, %arg1: memref<1x1x192xbf16, #tpu.memory_space<vmem>>, %arg2: memref<192x1024xbf16, #tpu.memory_space<vmem>>, %arg3: memref<1x1024xf32, #tpu.memory_space<vmem>>, %arg4: memref<1024x128xf32, #tpu.memory_space<vmem>>, %arg5: memref<1x128xf32, #tpu.memory_space<vmem>>, %arg6: memref<1x1x128xf32, #tpu.memory_space<vmem>>) attributes {dimension_semantics = [#tpu.dimension_semantics<parallel>], iteration_bounds = array<i64: 2>, scalar_prefetch = 0 : i64, scratch_operands = 0 : i64, tpu.core_type = #tpu.core_type<tc>, window_params = [{transform_indices = @transform_0, window_bounds = array<i64: 1, 1, 192>}, {pipeline_mode = #tpu.pipeline_mode<synchronous>, transform_indices = @transform_1, window_bounds = array<i64: 192, 1024>}, {pipeline_mode = #tpu.pipeline_mode<synchronous>, transform_indices = @transform_2, window_bounds = array<i64: 1, 1024>}, {pipeline_mode = #tpu.pipeline_mode<synchronous>, transform_indices = @transform_3, window_bounds = array<i64: 1024, 128>}, {pipeline_mode = #tpu.pipeline_mode<synchronous>, transform_indices = @transform_4, window_bounds = array<i64: 1, 128>}, {transform_indices = @transform_5, window_bounds = array<i64: 1, 1, 128>}]} {
    %c0 = arith.constant 0 : index
    %c0_0 = arith.constant 0 : index
    %c0_1 = arith.constant 0 : index
    %0 = vector.load %arg1[%c0, %c0_0, %c0_1] : memref<1x1x192xbf16, #tpu.memory_space<vmem>>, vector<1x1x192xbf16>
    %1 = vector.shape_cast %0 : vector<1x1x192xbf16> to vector<1x192xbf16>
    %c0_2 = arith.constant 0 : index
    %c0_3 = arith.constant 0 : index
    %2 = vector.load %arg2[%c0_2, %c0_3] : memref<192x1024xbf16, #tpu.memory_space<vmem>>, vector<192x1024xbf16>
    %cst = arith.constant dense<0.000000e+00> : vector<1x1024xf32>
    %3 = tpu.matmul %1, %2, %cst {dimension_numbers = #tpu.dot_dimension_numbers<[1], [0], [0], [1], [0, 0, 1, 1], [], []>} : vector<1x192xbf16>, vector<192x1024xbf16>, vector<1x1024xf32> -> vector<1x1024xf32>
    %c0_4 = arith.constant 0 : index
    %c0_5 = arith.constant 0 : index
    %4 = vector.load %arg3[%c0_4, %c0_5] : memref<1x1024xf32, #tpu.memory_space<vmem>>, vector<1x1024xf32>
    %5 = arith.addf %3, %4 : vector<1x1024xf32>
    %cst_6 = arith.constant 0.000000e+00 : f32
    %6 = vector.broadcast %cst_6 : f32 to vector<1x1024xf32>
    %7 = arith.maximumf %5, %6 : vector<1x1024xf32>
    %cst_7 = arith.constant dense<0.000000e+00> : vector<1024xf32>
    %8 = vector.multi_reduction <add>, %7, %cst_7 [0] : vector<1x1024xf32> to vector<1024xf32>
    %9 = vector.shape_cast %8 : vector<1024xf32> to vector<1x1024xf32>
    %cst_8 = arith.constant 1.000000e+00 : f32
    %10 = vector.broadcast %cst_8 : f32 to vector<1x1024xf32>
    %11 = arith.divf %9, %10 : vector<1x1024xf32>
    %c0_9 = arith.constant 0 : index
    %c0_10 = arith.constant 0 : index
    %12 = vector.load %arg4[%c0_9, %c0_10] : memref<1024x128xf32, #tpu.memory_space<vmem>>, vector<1024x128xf32>
    %cst_11 = arith.constant dense<0.000000e+00> : vector<1x128xf32>
    %13 = tpu.matmul %11, %12, %cst_11 {dimension_numbers = #tpu.dot_dimension_numbers<[1], [0], [0], [1], [0, 0, 1, 1], [], []>} : vector<1x1024xf32>, vector<1024x128xf32>, vector<1x128xf32> -> vector<1x128xf32>
    %c0_12 = arith.constant 0 : index
    %c0_13 = arith.constant 0 : index
    %14 = vector.load %arg5[%c0_12, %c0_13] : memref<1x128xf32, #tpu.memory_space<vmem>>, vector<1x128xf32>
    %15 = arith.addf %13, %14 : vector<1x128xf32>
    %16 = vector.shape_cast %15 : vector<1x128xf32> to vector<1x1x128xf32>
    %c0_14 = arith.constant 0 : index
    %c0_15 = arith.constant 0 : index
    %c0_16 = arith.constant 0 : index
    %17 = vector.load %arg6[%c0_14, %c0_15, %c0_16] : memref<1x1x128xf32, #tpu.memory_space<vmem>>, vector<1x1x128xf32>
    tpu.vector_store %arg6[%c0_14, %c0_15, %c0_16], %16 {strides = array<i32>} : memref<1x1x128xf32, #tpu.memory_space<vmem>>, vector<1x1x128xf32>,
    return
  }
  func.func @transform_0(%arg0: i32) -> (i32, i32, i32) {
    %c0_i32 = arith.constant 0 : i32
    %c0_i32_0 = arith.constant 0 : i32
    %c0_i32_1 = arith.constant 0 : i32
    return %arg0, %c0_i32, %c0_i32_0 : i32, i32, i32
  }
  func.func @transform_1(%arg0: i32) -> (i32, i32) {
    %c0_i32 = arith.constant 0 : i32
    %c0_i32_0 = arith.constant 0 : i32
    %c0_i32_1 = arith.constant 0 : i32
    return %c0_i32, %c0_i32_0 : i32, i32
  }
  func.func @transform_2(%arg0: i32) -> (i32, i32) {
    %c0_i32 = arith.constant 0 : i32
    %c0_i32_0 = arith.constant 0 : i32
    %c0_i32_1 = arith.constant 0 : i32
    return %c0_i32, %c0_i32_0 : i32, i32
  }
  func.func @transform_3(%arg0: i32) -> (i32, i32) {
    %c0_i32 = arith.constant 0 : i32
    %c0_i32_0 = arith.constant 0 : i32
    %c0_i32_1 = arith.constant 0 : i32
    return %c0_i32, %c0_i32_0 : i32, i32
  }
  func.func @transform_4(%arg0: i32) -> (i32, i32) {
    %c0_i32 = arith.constant 0 : i32
    %c0_i32_0 = arith.constant 0 : i32
    %c0_i32_1 = arith.constant 0 : i32
    return %c0_i32, %c0_i32_0 : i32, i32
  }
  func.func @transform_5(%arg0: i32) -> (i32, i32, i32) {
    %c0_i32 = arith.constant 0 : i32
    %c0_i32_0 = arith.constant 0 : i32
    %c0_i32_1 = arith.constant 0 : i32
    return %arg0, %c0_i32, %c0_i32_0 : i32, i32, i32
  }
}

</mosaic_0001>

<llo_original>
// kernel: road_classifier_forward.29
$region0: #{road_classifier_forward.29}
  #allocation0 [shape = 'u32[]', space=smem, size = 0x4, offset = 0x4, fixed_abs, tag = 'smem constant byte address 0x4 - core index']
  #allocation1 [shape = 'u32[144,128]{1,0:T(1,128)}', space=vmem, size = 0x12000, scoped, tag = 'internal scratch']
  %s0 = inlined_call_operand.vmem [shape: bf16[128,24], index: 0, kind: input, shape index: {}]
  %s1 = inlined_call_operand.vmem [shape: bf16[24,24], index: 1, kind: input, shape index: {}]
  %s2 = inlined_call_operand.vmem [shape: f32[1,24], index: 2, kind: input, shape index: {}]
  %s3 = inlined_call_operand.vmem [shape: bf16[128,24], index: 3, kind: output, shape index: {}]
  %s4 = sld [smem:[#allocation0]]
  $region22: #{road_classifier_forward.29} parent=0
    _
  %s6 = ssub.s32 1, %s4
  %s7 = scalar_select 0, %s6, %s4
  // Predicated region
  $region2: #{road_classifier_forward.29} parent=0 // pred_check
    _
  $region3: #{road_classifier_forward.29} parent=0 // pred_check_branch
    %9 = sbr.rel (0) target = $region5
  $region4: #{road_classifier_forward.29} parent=0 // pred_region
    _
  $region5: #{road_classifier_forward.29} parent=0 // pred_fallthru
    _
  // Predicated region
  $region6: #{road_classifier_forward.29} parent=0 // pred_check
    _
  $region7: #{road_classifier_forward.29} parent=0 // pred_check_branch
    %11 = sbr.rel (0) target = $region9
  $region8: #{road_classifier_forward.29} parent=0 // pred_region
    _
  $region9: #{road_classifier_forward.29} parent=0 // pred_fallthru
    _
  // Predicated region
  $region10: #{road_classifier_forward.29} parent=0 // pred_check
    _
  $region11: #{road_classifier_forward.29} parent=0 // pred_check_branch
    %13 = sbr.rel (0) target = $region13
  $region12: #{road_classifier_forward.29} parent=0 // pred_region
    _
  $region13: #{road_classifier_forward.29} parent=0 // pred_fallthru
    _
  %v15 = vld [vmem:[%s0] sm:$0xf]
  %v16 = vld [vmem:[%s0 + $0x4] sm:$0xf]
  %v17 = vld [vmem:[%s0 + $0x8] sm:$0xf]
  %v18 = vld [vmem:[%s0 + $0xc] sm:$0xf]
  %v19 = vld [vmem:[%s0 + $0x10] sm:$0xf]
  %v20 = vld [vmem:[%s0 + $0x14] sm:$0xf]
  %v21 = vld [vmem:[%s0 + $0x18] sm:$0xf]
  %v22 = vld [vmem:[%s0 + $0x1c] sm:$0xf]
  %v23 = vld [vmem:[%s0 + $0x20] sm:$0xf]
  %v24 = vld [vmem:[%s0 + $0x24] sm:$0xf]
  %v25 = vld [vmem:[%s0 + $0x28] sm:$0xf]
  %v26 = vld [vmem:[%s0 + $0x2c] sm:$0xf]
  %v27 = vld [vmem:[%s0 + $0x30] sm:$0xf]
  %v28 = vld [vmem:[%s0 + $0x34] sm:$0xf]
  %v29 = vld [vmem:[%s0 + $0x38] sm:$0xf]
  %v30 = vld [vmem:[%s0 + $0x3c] sm:$0xf]
  %v31 = vld [vmem:[%s1] sm:$0xf]
  %v32 = vld [vmem:[%s1 + $0x4] sm:$0xf]
  %v33 = vld [vmem:[%s1 + $0x8] sm:$0xf]
  %v34 = vld [vmem:[%s2] sm:$0x1]
  %v36 = vlaneseq
  %v37 = vshrl.u32 %v36, 7
  %v38 = vsub.s32 0, %v37
  %v39 = vrot.slane %v34, %v38
  %v57 = vunpack.c.l.b16 %v15
  %v58 = vunpack.c.l.b16 %v16
  %v59 = vunpack.c.l.b16 %v17
  %v60 = vunpack.c.l.b16 %v18
  %v61 = vunpack.c.l.b16 %v19
  %v62 = vunpack.c.l.b16 %v20
  %v63 = vunpack.c.l.b16 %v21
  %v64 = vunpack.c.l.b16 %v22
  %v65 = vunpack.c.l.b16 %v23
  %v66 = vunpack.c.l.b16 %v24
  %v67 = vunpack.c.l.b16 %v25
  %v68 = vunpack.c.l.b16 %v26
  %v69 = vunpack.c.l.b16 %v27
  %v70 = vunpack.c.l.b16 %v28
  %v71 = vunpack.c.l.b16 %v29
  %v72 = vunpack.c.l.b16 %v30
  %v73 = vpack.c.b16 %v58, %v57
  %v74 = vpack.c.b16 %v60, %v59
  %v75 = vpack.c.b16 %v62, %v61
  %v76 = vpack.c.b16 %v64, %v63
  %v77 = vpack.c.b16 %v66, %v65
  %v78 = vpack.c.b16 %v68, %v67
  %v79 = vpack.c.b16 %v70, %v69
  %v80 = vpack.c.b16 %v72, %v71
  %v84 = vunpack.c.l.b16 %v31
  %v85 = vunpack.c.l.b16 %v32
  %v86 = vunpack.c.l.b16 %v33
  %v87 = vpack.c.b16 %v85, %v84
  %v88 = vpack.c.b16 %v86, %v86
  %vm90 = vcmask 195584
  %v92 = vsel %vm90, %v73, 0
  %v95 = vsel %vm90, %v74, 0
  %v98 = vsel %vm90, %v75, 0
  %v101 = vsel %vm90, %v76, 0
  %v104 = vsel %vm90, %v77, 0
  %v107 = vsel %vm90, %v78, 0
  %v110 = vsel %vm90, %v79, 0
  %v113 = vsel %vm90, %v80, 0
  %vm115 = vcmask 1043456
  %v117 = vsel %vm115, %v88, 0
  %119 = vmatprep.subr.bf16.mxu0 0
  %120 = vmatpush1.bf16.msra.mxu0 0
  %121 = vmatprep.subr.bf16.mxu0 0
  %122 = vmatpush1.bf16.msra.mxu0 0
  %123 = vmatprep.subr.bf16.mxu0 0
  %124 = vmatpush1.bf16.msra.mxu0 0
  %125 = vmatprep.subr.bf16.mxu0 0
  %126 = vmatpush1.bf16.msra.mxu0 0
  %127 = vmatprep.subr.bf16.mxu0 0
  %128 = vmatpush1.bf16.msra.mxu0 0
  %129 = vmatprep.subr.bf16.mxu0 0
  %130 = vmatpush1.bf16.msra.mxu0 0
  %131 = vmatprep.subr.bf16.mxu0 0
  %132 = vmatpush1.bf16.msra.mxu0 %v117
  %133 = vmatprep.subr.bf16.mxu0 0
  %134 = vmatpush1.bf16.msra.mxu0 %v87
  %135 = vmatprep.subr.bf16.mxu0 0
  %136 = vmatpush2.bf16.msra.mxu0 0
  %137 = vmatprep.subr.bf16.mxu0 0
  %138 = vmatpush2.bf16.msra.mxu0 0
  %139 = vmatprep.subr.bf16.mxu0 0
  %140 = vmatpush2.bf16.msra.mxu0 0
  %141 = vmatprep.subr.bf16.mxu0 0
  %142 = vmatpush2.bf16.msra.mxu0 0
  %143 = vmatprep.subr.bf16.mxu0 0
  %144 = vmatpush2.bf16.msra.mxu0 0
  %145 = vmatprep.subr.bf16.mxu0 0
  %146 = vmatpush2.bf16.msra.mxu0 0
  %147 = vmatprep.subr.bf16.mxu0 0
  %148 = vmatpush2.bf16.msra.mxu0 0
  %149 = vmatprep.subr.bf16.mxu0 0
  %150 = vmatpush2.bf16.msra.mxu0 0
  %151 = vmatprep.mubr.bf16.mxu0 0
  %152 = vmatmul.mubr.bf16.gmra.mxu0 %v92
  %v153 = vpop.f32.mrf.mxu0
  %v154 = vadd.f32 %v39, %v153
  %v155 = vpop.f32.mrf.mxu0
  %v156 = vpop.f32.mrf.mxu0
  %v157 = vadd.f32 %v39, %v156
  %v158 = vpop.f32.mrf.mxu0
  %159 = vmatprep.mubr.bf16.mxu0 0
  %160 = vmatmul.mubr.bf16.gmra.mxu0 %v95
  %v161 = vpop.f32.mrf.mxu0
  %v162 = vadd.f32 %v39, %v161
  %v163 = vpop.f32.mrf.mxu0
  %v164 = vpop.f32.mrf.mxu0
  %v165 = vadd.f32 %v39, %v164
  %v166 = vpop.f32.mrf.mxu0
  %167 = vmatprep.mubr.bf16.mxu0 0
  %168 = vmatmul.mubr.bf16.gmra.mxu0 %v98
  %v169 = vpop.f32.mrf.mxu0
  %v170 = vadd.f32 %v39, %v169
  %v171 = vpop.f32.mrf.mxu0
  %v172 = vpop.f32.mrf.mxu0
  %v173 = vadd.f32 %v39, %v172
  %v174 = vpop.f32.mrf.mxu0
  %175 = vmatprep.mubr.bf16.mxu0 0
  %176 = vmatmul.mubr.bf16.gmra.mxu0 %v101
  %v177 = vpop.f32.mrf.mxu0
  %v178 = vadd.f32 %v39, %v177
  %v179 = vpop.f32.mrf.mxu0
  %v180 = vpop.f32.mrf.mxu0
  %v181 = vadd.f32 %v39, %v180
  %v182 = vpop.f32.mrf.mxu0
  %183 = vmatprep.mubr.bf16.mxu0 0
  %184 = vmatmul.mubr.bf16.gmra.mxu0 %v104
  %v185 = vpop.f32.mrf.mxu0
  %v186 = vadd.f32 %v39, %v185
  %v187 = vpop.f32.mrf.mxu0
  %v188 = vpop.f32.mrf.mxu0
  %v189 = vadd.f32 %v39, %v188
  %v190 = vpop.f32.mrf.mxu0
  %191 = vmatprep.mubr.bf16.mxu0 0
  %192 = vmatmul.mubr.bf16.gmra.mxu0 %v107
  %v193 = vpop.f32.mrf.mxu0
  %v194 = vadd.f32 %v39, %v193
  %v195 = vpop.f32.mrf.mxu0
  %v196 = vpop.f32.mrf.mxu0
  %v197 = vadd.f32 %v39, %v196
  %v198 = vpop.f32.mrf.mxu0
  %199 = vmatprep.mubr.bf16.mxu0 0
  %200 = vmatmul.mubr.bf16.gmra.mxu0 %v110
  %v201 = vpop.f32.mrf.mxu0
  %v202 = vadd.f32 %v39, %v201
  %v203 = vpop.f32.mrf.mxu0
  %v204 = vpop.f32.mrf.mxu0
  %v205 = vadd.f32 %v39, %v204
  %v206 = vpop.f32.mrf.mxu0
  %207 = vmatprep.mubr.bf16.mxu0 0
  %208 = vmatmul.mubr.bf16.gmra.mxu0 %v113
  %v209 = vpop.f32.mrf.mxu0
  %v210 = vadd.f32 %v39, %v209
  %v211 = vpop.f32.mrf.mxu0
  %v212 = vpop.f32.mrf.mxu0
  %v213 = vadd.f32 %v39, %v212
  %v214 = vpop.f32.mrf.mxu0
  %215 = vdwg.mxu0
  %v216 = vmax.f32 %v154, 0.0
  %v217 = vmax.f32 %v157, 0.0
  %v218 = vmax.f32 %v162, 0.0
  %v219 = vmax.f32 %v165, 0.0
  %v220 = vmax.f32 %v170, 0.0
  %v221 = vmax.f32 %v173, 0.0
  %v222 = vmax.f32 %v178, 0.0
  %v223 = vmax.f32 %v181, 0.0
  %v224 = vmax.f32 %v186, 0.0
  %v225 = vmax.f32 %v189, 0.0
  %v226 = vmax.f32 %v194, 0.0
  %v227 = vmax.f32 %v197, 0.0
  %v228 = vmax.f32 %v202, 0.0
  %v229 = vmax.f32 %v205, 0.0
  %v230 = vmax.f32 %v210, 0.0
  %v231 = vmax.f32 %v213, 0.0
  %v232 = vpack.c.bf16 %v217, %v216
  %v233 = vpack.c.bf16 %v219, %v218
  %v234 = vpack.c.bf16 %v221, %v220
  %v235 = vpack.c.bf16 %v223, %v222
  %v236 = vpack.c.bf16 %v225, %v224
  %v237 = vpack.c.bf16 %v227, %v226
  %v238 = vpack.c.bf16 %v229, %v228
  %v239 = vpack.c.bf16 %v231, %v230
  %v248 = vunpack.c.l.b16 %v232
  %v249 = vunpack.c.h.b16 %v232
  %v250 = vunpack.c.l.b16 %v233
  %v251 = vunpack.c.h.b16 %v233
  %v252 = vunpack.c.l.b16 %v234
  %v253 = vunpack.c.h.b16 %v234
  %v254 = vunpack.c.l.b16 %v235
  %v255 = vunpack.c.h.b16 %v235
  %v256 = vunpack.c.l.b16 %v236
  %v257 = vunpack.c.h.b16 %v236
  %v258 = vunpack.c.l.b16 %v237
  %v259 = vunpack.c.h.b16 %v237
  %v260 = vunpack.c.l.b16 %v238
  %v261 = vunpack.c.h.b16 %v238
  %v262 = vunpack.c.l.b16 %v239
  %v263 = vunpack.c.h.b16 %v239
  %v264 = vpack.c.b16 %v248, %v248
  %v265 = vpack.c.b16 %v249, %v249
  %v266 = vpack.c.b16 %v250, %v250
  %v267 = vpack.c.b16 %v251, %v251
  %v268 = vpack.c.b16 %v252, %v252
  %v269 = vpack.c.b16 %v253, %v253
  %v270 = vpack.c.b16 %v254, %v254
  %v271 = vpack.c.b16 %v255, %v255
  %v272 = vpack.c.b16 %v256, %v256
  %v273 = vpack.c.b16 %v257, %v257
  %v274 = vpack.c.b16 %v258, %v258
  %v275 = vpack.c.b16 %v259, %v259
  %v276 = vpack.c.b16 %v260, %v260
  %v277 = vpack.c.b16 %v261, %v261
  %v278 = vpack.c.b16 %v262, %v262
  %v279 = vpack.c.b16 %v263, %v263
  %vm296 = vcmask 191488
  %297 = vst.msk [vmem:[%s3] sm:$0xf] %vm296, %v264
  %298 = vst.msk [vmem:[%s3 + $0x4] sm:$0xf] %vm296, %v265
  %299 = vst.msk [vmem:[%s3 + $0x8] sm:$0xf] %vm296, %v266
  %300 = vst.msk [vmem:[%s3 + $0xc] sm:$0xf] %vm296, %v267
  %301 = vst.msk [vmem:[%s3 + $0x10] sm:$0xf] %vm296, %v268
  %302 = vst.msk [vmem:[%s3 + $0x14] sm:$0xf] %vm296, %v269
  %303 = vst.msk [vmem:[%s3 + $0x18] sm:$0xf] %vm296, %v270
  %304 = vst.msk [vmem:[%s3 + $0x1c] sm:$0xf] %vm296, %v271
  %305 = vst.msk [vmem:[%s3 + $0x20] sm:$0xf] %vm296, %v272
  %306 = vst.msk [vmem:[%s3 + $0x24] sm:$0xf] %vm296, %v273
  %307 = vst.msk [vmem:[%s3 + $0x28] sm:$0xf] %vm296, %v274
  %308 = vst.msk [vmem:[%s3 + $0x2c] sm:$0xf] %vm296, %v275
  %309 = vst.msk [vmem:[%s3 + $0x30] sm:$0xf] %vm296, %v276
  %310 = vst.msk [vmem:[%s3 + $0x34] sm:$0xf] %vm296, %v277
  %311 = vst.msk [vmem:[%s3 + $0x38] sm:$0xf] %vm296, %v278
  %312 = vst.msk [vmem:[%s3 + $0x3c] sm:$0xf] %vm296, %v279
  // Predicated region
  $region14: #{road_classifier_forward.29} parent=0 // pred_check
    _
  $region15: #{road_classifier_forward.29} parent=0 // pred_check_branch
    %314 = sbr.rel (0) target = $region17
  $region16: #{road_classifier_forward.29} parent=0 // pred_region
    _
  $region17: #{road_classifier_forward.29} parent=0 // pred_fallthru
    _
  // Predicated region
  $region18: #{road_classifier_forward.29} parent=0 // pred_check
    _
  $region19: #{road_classifier_forward.29} parent=0 // pred_check_branch
    %316 = sbr.rel (0) target = $region21
  $region20: #{road_classifier_forward.29} parent=0 // pred_region
    _
  $region21: #{road_classifier_forward.29} parent=0 // pred_fallthru
    _

// kernel: road_classifier_forward.30
$region0: #{road_classifier_forward.30}
  #allocation0 [shape = 'u32[]', space=smem, size = 0x4, offset = 0x4, fixed_abs, tag = 'smem constant byte address 0x4 - core index']
  #allocation1 [shape = 'u32[144,128]{1,0:T(1,128)}', space=vmem, size = 0x12000, scoped, tag = 'internal scratch']
  %s0 = inlined_call_operand.vmem [shape: bf16[32,24], index: 0, kind: input, shape index: {}]
  %s1 = inlined_call_operand.vmem [shape: bf16[24,24], index: 1, kind: input, shape index: {}]
  %s2 = inlined_call_operand.vmem [shape: f32[1,24], index: 2, kind: input, shape index: {}]
  %s3 = inlined_call_operand.vmem [shape: bf16[32,24], index: 3, kind: output, shape index: {}]
  %s4 = sld [smem:[#allocation0]]
  $region22: #{road_classifier_forward.30} parent=0
    _
  %s6 = ssub.s32 1, %s4
  %s7 = scalar_select 0, %s6, %s4
  // Predicated region
  $region2: #{road_classifier_forward.30} parent=0 // pred_check
    _
  $region3: #{road_classifier_forward.30} parent=0 // pred_check_branch
    %9 = sbr.rel (0) target = $region5
  $region4: #{road_classifier_forward.30} parent=0 // pred_region
    _
  $region5: #{road_classifier_forward.30} parent=0 // pred_fallthru
    _
  // Predicated region
  $region6: #{road_classifier_forward.30} parent=0 // pred_check
    _
  $region7: #{road_classifier_forward.30} parent=0 // pred_check_branch
    %11 = sbr.rel (0) target = $region9
  $region8: #{road_classifier_forward.30} parent=0 // pred_region
    _
  $region9: #{road_classifier_forward.30} parent=0 // pred_fallthru
    _
  // Predicated region
  $region10: #{road_classifier_forward.30} parent=0 // pred_check
    _
  $region11: #{road_classifier_forward.30} parent=0 // pred_check_branch
    %13 = sbr.rel (0) target = $region13
  $region12: #{road_classifier_forward.30} parent=0 // pred_region
    _
  $region13: #{road_classifier_forward.30} parent=0 // pred_fallthru
    _
  %v15 = vld [vmem:[%s0] sm:$0xf]
  %v16 = vld [vmem:[%s0 + $0x4] sm:$0xf]
  %v17 = vld [vmem:[%s0 + $0x8] sm:$0xf]
  %v18 = vld [vmem:[%s0 + $0xc] sm:$0xf]
  %v19 = vld [vmem:[%s1] sm:$0xf]
  %v20 = vld [vmem:[%s1 + $0x4] sm:$0xf]
  %v21 = vld [vmem:[%s1 + $0x8] sm:$0xf]
  %v22 = vld [vmem:[%s2] sm:$0x1]
  %v24 = vlaneseq
  %v25 = vshrl.u32 %v24, 7
  %v26 = vsub.s32 0, %v25
  %v27 = vrot.slane %v22, %v26
  %v33 = vunpack.c.l.b16 %v15
  %v34 = vunpack.c.l.b16 %v16
  %v35 = vunpack.c.l.b16 %v17
  %v36 = vunpack.c.l.b16 %v18
  %v37 = vpack.c.b16 %v34, %v33
  %v38 = vpack.c.b16 %v36, %v35
  %v42 = vunpack.c.l.b16 %v19
  %v43 = vunpack.c.l.b16 %v20
  %v44 = vunpack.c.l.b16 %v21
  %v45 = vpack.c.b16 %v43, %v42
  %v46 = vpack.c.b16 %v44, %v44
  %vm48 = vcmask 195584
  %v50 = vsel %vm48, %v37, 0
  %v53 = vsel %vm48, %v38, 0
  %vm55 = vcmask 1043456
  %v57 = vsel %vm55, %v46, 0
  %59 = vmatprep.subr.bf16.mxu0 0
  %60 = vmatpush1.bf16.msra.mxu0 0
  %61 = vmatprep.subr.bf16.mxu0 0
  %62 = vmatpush1.bf16.msra.mxu0 0
  %63 = vmatprep.subr.bf16.mxu0 0
  %64 = vmatpush1.bf16.msra.mxu0 0
  %65 = vmatprep.subr.bf16.mxu0 0
  %66 = vmatpush1.bf16.msra.mxu0 0
  %67 = vmatprep.subr.bf16.mxu0 0
  %68 = vmatpush1.bf16.msra.mxu0 0
  %69 = vmatprep.subr.bf16.mxu0 0
  %70 = vmatpush1.bf16.msra.mxu0 0
  %71 = vmatprep.subr.bf16.mxu0 0
  %72 = vmatpush1.bf16.msra.mxu0 %v57
  %73 = vmatprep.subr.bf16.mxu0 0
  %74 = vmatpush1.bf16.msra.mxu0 %v45
  %75 = vmatprep.subr.bf16.mxu0 0
  %76 = vmatpush2.bf16.msra.mxu0 0
  %77 = vmatprep.subr.bf16.mxu0 0
  %78 = vmatpush2.bf16.msra.mxu0 0
  %79 = vmatprep.subr.bf16.mxu0 0
  %80 = vmatpush2.bf16.msra.mxu0 0
  %81 = vmatprep.subr.bf16.mxu0 0
  %82 = vmatpush2.bf16.msra.mxu0 0
  %83 = vmatprep.subr.bf16.mxu0 0
  %84 = vmatpush2.bf16.msra.mxu0 0
  %85 = vmatprep.subr.bf16.mxu0 0
  %86 = vmatpush2.bf16.msra.mxu0 0
  %87 = vmatprep.subr.bf16.mxu0 0
  %88 = vmatpush2.bf16.msra.mxu0 0
  %89 = vmatprep.subr.bf16.mxu0 0
  %90 = vmatpush2.bf16.msra.mxu0 0
  %91 = vmatprep.mubr.bf16.mxu0 0
  %92 = vmatmul.mubr.bf16.gmra.mxu0 %v50
  %v93 = vpop.f32.mrf.mxu0
  %v94 = vadd.f32 %v27, %v93
  %v95 = vpop.f32.mrf.mxu0
  %v96 = vpop.f32.mrf.mxu0
  %v97 = vadd.f32 %v27, %v96
  %v98 = vpop.f32.mrf.mxu0
  %99 = vmatprep.mubr.bf16.mxu0 0
  %100 = vmatmul.mubr.bf16.gmra.mxu0 %v53
  %v101 = vpop.f32.mrf.mxu0
  %v102 = vadd.f32 %v27, %v101
  %v103 = vpop.f32.mrf.mxu0
  %v104 = vpop.f32.mrf.mxu0
  %v105 = vadd.f32 %v27, %v104
  %v106 = vpop.f32.mrf.mxu0
  %107 = vdwg.mxu0
  %v108 = vmax.f32 %v94, 0.0
  %v109 = vmax.f32 %v97, 0.0
  %v110 = vmax.f32 %v102, 0.0
  %v111 = vmax.f32 %v105, 0.0
  %v112 = vpack.c.bf16 %v109, %v108
  %v113 = vpack.c.bf16 %v111, %v110
  %v116 = vunpack.c.l.b16 %v112
  %v117 = vunpack.c.h.b16 %v112
  %v118 = vunpack.c.l.b16 %v113
  %v119 = vunpack.c.h.b16 %v113
  %v120 = vpack.c.b16 %v116, %v116
  %v121 = vpack.c.b16 %v117, %v117
  %v122 = vpack.c.b16 %v118, %v118
  %v123 = vpack.c.b16 %v119, %v119
  %vm128 = vcmask 191488
  %129 = vst.msk [vmem:[%s3] sm:$0xf] %vm128, %v120
  %130 = vst.msk [vmem:[%s3 + $0x4] sm:$0xf] %vm128, %v121
  %131 = vst.msk [vmem:[%s3 + $0x8] sm:$0xf] %vm128, %v122
  %132 = vst.msk [vmem:[%s3 + $0xc] sm:$0xf] %vm128, %v123
  // Predicated region
  $region14: #{road_classifier_forward.30} parent=0 // pred_check
    _
  $region15: #{road_classifier_forward.30} parent=0 // pred_check_branch
    %134 = sbr.rel (0) target = $region17
  $region16: #{road_classifier_forward.30} parent=0 // pred_region
    _
  $region17: #{road_classifier_forward.30} parent=0 // pred_fallthru
    _
  // Predicated region
  $region18: #{road_classifier_forward.30} parent=0 // pred_check
    _
  $region19: #{road_classifier_forward.30} parent=0 // pred_check_branch
    %136 = sbr.rel (0) target = $region21
  $region20: #{road_classifier_forward.30} parent=0 // pred_region
    _
  $region21: #{road_classifier_forward.30} parent=0 // pred_fallthru
    _

// kernel: road_classifier_forward.38
$region0: #{road_classifier_forward.38}
  #allocation0 [shape = 'u32[]', space=smem, size = 0x4, offset = 0x4, fixed_abs, tag = 'smem constant byte address 0x4 - core index']
  #allocation1 [shape = 'u32[144,128]{1,0:T(1,128)}', space=vmem, size = 0x12000, scoped, tag = 'internal scratch']
  %s0 = inlined_call_operand.vmem [shape: bf16[32,48], index: 0, kind: input, shape index: {}]
  %s1 = inlined_call_operand.vmem [shape: bf16[48,48], index: 1, kind: input, shape index: {}]
  %s2 = inlined_call_operand.vmem [shape: f32[1,48], index: 2, kind: input, shape index: {}]
  %s3 = inlined_call_operand.vmem [shape: bf16[32,48], index: 3, kind: output, shape index: {}]
  %s4 = sld [smem:[#allocation0]]
  $region22: #{road_classifier_forward.38} parent=0
    _
  %s6 = ssub.s32 1, %s4
  %s7 = scalar_select 0, %s6, %s4
  // Predicated region
  $region2: #{road_classifier_forward.38} parent=0 // pred_check
    _
  $region3: #{road_classifier_forward.38} parent=0 // pred_check_branch
    %9 = sbr.rel (0) target = $region5
  $region4: #{road_classifier_forward.38} parent=0 // pred_region
    _
  $region5: #{road_classifier_forward.38} parent=0 // pred_fallthru
    _
  // Predicated region
  $region6: #{road_classifier_forward.38} parent=0 // pred_check
    _
  $region7: #{road_classifier_forward.38} parent=0 // pred_check_branch
    %11 = sbr.rel (0) target = $region9
  $region8: #{road_classifier_forward.38} parent=0 // pred_region
    _
  $region9: #{road_classifier_forward.38} parent=0 // pred_fallthru
    _
  // Predicated region
  $region10: #{road_classifier_forward.38} parent=0 // pred_check
    _
  $region11: #{road_classifier_forward.38} parent=0 // pred_check_branch
    %13 = sbr.rel (0) target = $region13
  $region12: #{road_classifier_forward.38} parent=0 // pred_region
    _
  $region13: #{road_classifier_forward.38} parent=0 // pred_fallthru
    _
  %v15 = vld [vmem:[%s0] sm:$0xf]
  %v16 = vld [vmem:[%s0 + $0x4] sm:$0xf]
  %v17 = vld [vmem:[%s0 + $0x8] sm:$0xf]
  %v18 = vld [vmem:[%s0 + $0xc] sm:$0xf]
  %v19 = vld [vmem:[%s1] sm:$0xf]
  %v20 = vld [vmem:[%s1 + $0x4] sm:$0xf]
  %v21 = vld [vmem:[%s1 + $0x8] sm:$0xf]
  %v22 = vld [vmem:[%s1 + $0xc] sm:$0xf]
  %v23 = vld [vmem:[%s1 + $0x10] sm:$0xf]
  %v24 = vld [vmem:[%s1 + $0x14] sm:$0xf]
  %v25 = vld [vmem:[%s2] sm:$0x1]
  %v27 = vlaneseq
  %v28 = vshrl.u32 %v27, 7
  %v29 = vsub.s32 0, %v28
  %v30 = vrot.slane %v25, %v29
  %v36 = vunpack.c.l.b16 %v15
  %v37 = vunpack.c.l.b16 %v16
  %v38 = vunpack.c.l.b16 %v17
  %v39 = vunpack.c.l.b16 %v18
  %v40 = vpack.c.b16 %v37, %v36
  %v41 = vpack.c.b16 %v39, %v38
  %v48 = vunpack.c.l.b16 %v19
  %v49 = vunpack.c.l.b16 %v20
  %v50 = vunpack.c.l.b16 %v21
  %v51 = vunpack.c.l.b16 %v22
  %v52 = vunpack.c.l.b16 %v23
  %v53 = vunpack.c.l.b16 %v24
  %v54 = vpack.c.b16 %v49, %v48
  %v55 = vpack.c.b16 %v51, %v50
  %v56 = vpack.c.b16 %v53, %v52
  %vm60 = vcmask 392192
  %v62 = vsel %vm60, %v40, 0
  %v65 = vsel %vm60, %v41, 0
  %67 = vmatprep.subr.bf16.mxu0 0
  %68 = vmatpush1.bf16.msra.mxu0 0
  %69 = vmatprep.subr.bf16.mxu0 0
  %70 = vmatpush1.bf16.msra.mxu0 0
  %71 = vmatprep.subr.bf16.mxu0 0
  %72 = vmatpush1.bf16.msra.mxu0 0
  %73 = vmatprep.subr.bf16.mxu0 0
  %74 = vmatpush1.bf16.msra.mxu0 0
  %75 = vmatprep.subr.bf16.mxu0 0
  %76 = vmatpush1.bf16.msra.mxu0 0
  %77 = vmatprep.subr.bf16.mxu0 0
  %78 = vmatpush1.bf16.msra.mxu0 %v56
  %79 = vmatprep.subr.bf16.mxu0 0
  %80 = vmatpush1.bf16.msra.mxu0 %v55
  %81 = vmatprep.subr.bf16.mxu0 0
  %82 = vmatpush1.bf16.msra.mxu0 %v54
  %83 = vmatprep.subr.bf16.mxu0 0
  %84 = vmatpush2.bf16.msra.mxu0 0
  %85 = vmatprep.subr.bf16.mxu0 0
  %86 = vmatpush2.bf16.msra.mxu0 0
  %87 = vmatprep.subr.bf16.mxu0 0
  %88 = vmatpush2.bf16.msra.mxu0 0
  %89 = vmatprep.subr.bf16.mxu0 0
  %90 = vmatpush2.bf16.msra.mxu0 0
  %91 = vmatprep.subr.bf16.mxu0 0
  %92 = vmatpush2.bf16.msra.mxu0 0
  %93 = vmatprep.subr.bf16.mxu0 0
  %94 = vmatpush2.bf16.msra.mxu0 0
  %95 = vmatprep.subr.bf16.mxu0 0
  %96 = vmatpush2.bf16.msra.mxu0 0
  %97 = vmatprep.subr.bf16.mxu0 0
  %98 = vmatpush2.bf16.msra.mxu0 0
  %99 = vmatprep.mubr.bf16.mxu0 0
  %100 = vmatmul.mubr.bf16.gmra.mxu0 %v62
  %v101 = vpop.f32.mrf.mxu0
  %v102 = vadd.f32 %v30, %v101
  %v103 = vpop.f32.mrf.mxu0
  %v104 = vpop.f32.mrf.mxu0
  %v105 = vadd.f32 %v30, %v104
  %v106 = vpop.f32.mrf.mxu0
  %107 = vmatprep.mubr.bf16.mxu0 0
  %108 = vmatmul.mubr.bf16.gmra.mxu0 %v65
  %v109 = vpop.f32.mrf.mxu0
  %v110 = vadd.f32 %v30, %v109
  %v111 = vpop.f32.mrf.mxu0
  %v112 = vpop.f32.mrf.mxu0
  %v113 = vadd.f32 %v30, %v112
  %v114 = vpop.f32.mrf.mxu0
  %115 = vdwg.mxu0
  %v116 = vmax.f32 %v102, 0.0
  %v117 = vmax.f32 %v105, 0.0
  %v118 = vmax.f32 %v110, 0.0
  %v119 = vmax.f32 %v113, 0.0
  %v120 = vpack.c.bf16 %v117, %v116
  %v121 = vpack.c.bf16 %v119, %v118
  %v124 = vunpack.c.l.b16 %v120
  %v125 = vunpack.c.h.b16 %v120
  %v126 = vunpack.c.l.b16 %v121
  %v127 = vunpack.c.h.b16 %v121
  %v128 = vpack.c.b16 %v124, %v124
  %v129 = vpack.c.b16 %v125, %v125
  %v130 = vpack.c.b16 %v126, %v126
  %v131 = vpack.c.b16 %v127, %v127
  %vm136 = vcmask 388096
  %137 = vst.msk [vmem:[%s3] sm:$0xf] %vm136, %v128
  %138 = vst.msk [vmem:[%s3 + $0x4] sm:$0xf] %vm136, %v129
  %139 = vst.msk [vmem:[%s3 + $0x8] sm:$0xf] %vm136, %v130
  %140 = vst.msk [vmem:[%s3 + $0xc] sm:$0xf] %vm136, %v131
  // Predicated region
  $region14: #{road_classifier_forward.38} parent=0 // pred_check
    _
  $region15: #{road_classifier_forward.38} parent=0 // pred_check_branch
    %142 = sbr.rel (0) target = $region17
  $region16: #{road_classifier_forward.38} parent=0 // pred_region
    _
  $region17: #{road_classifier_forward.38} parent=0 // pred_fallthru
    _
  // Predicated region
  $region18: #{road_classifier_forward.38} parent=0 // pred_check
    _
  $region19: #{road_classifier_forward.38} parent=0 // pred_check_branch
    %144 = sbr.rel (0) target = $region21
  $region20: #{road_classifier_forward.38} parent=0 // pred_region
    _
  $region21: #{road_classifier_forward.38} parent=0 // pred_fallthru
    _

// kernel: road_classifier_forward.39
$region0: #{road_classifier_forward.39}
  #allocation0 [shape = 'u32[]', space=smem, size = 0x4, offset = 0x4, fixed_abs, tag = 'smem constant byte address 0x4 - core index']
  #allocation1 [shape = 'u32[144,128]{1,0:T(1,128)}', space=vmem, size = 0x12000, scoped, tag = 'internal scratch']
  %s0 = inlined_call_operand.vmem [shape: bf16[8,48], index: 0, kind: input, shape index: {}]
  %s1 = inlined_call_operand.vmem [shape: bf16[48,48], index: 1, kind: input, shape index: {}]
  %s2 = inlined_call_operand.vmem [shape: f32[1,48], index: 2, kind: input, shape index: {}]
  %s3 = inlined_call_operand.vmem [shape: bf16[8,48], index: 3, kind: output, shape index: {}]
  %s4 = sld [smem:[#allocation0]]
  $region22: #{road_classifier_forward.39} parent=0
    _
  %s6 = ssub.s32 1, %s4
  %s7 = scalar_select 0, %s6, %s4
  // Predicated region
  $region2: #{road_classifier_forward.39} parent=0 // pred_check
    _
  $region3: #{road_classifier_forward.39} parent=0 // pred_check_branch
    %9 = sbr.rel (0) target = $region5
  $region4: #{road_classifier_forward.39} parent=0 // pred_region
    _
  $region5: #{road_classifier_forward.39} parent=0 // pred_fallthru
    _
  // Predicated region
  $region6: #{road_classifier_forward.39} parent=0 // pred_check
    _
  $region7: #{road_classifier_forward.39} parent=0 // pred_check_branch
    %11 = sbr.rel (0) target = $region9
  $region8: #{road_classifier_forward.39} parent=0 // pred_region
    _
  $region9: #{road_classifier_forward.39} parent=0 // pred_fallthru
    _
  // Predicated region
  $region10: #{road_classifier_forward.39} parent=0 // pred_check
    _
  $region11: #{road_classifier_forward.39} parent=0 // pred_check_branch
    %13 = sbr.rel (0) target = $region13
  $region12: #{road_classifier_forward.39} parent=0 // pred_region
    _
  $region13: #{road_classifier_forward.39} parent=0 // pred_fallthru
    _
  %v15 = vld [vmem:[%s0] sm:$0xf]
  %v16 = vld [vmem:[%s1] sm:$0xf]
  %v17 = vld [vmem:[%s1 + $0x4] sm:$0xf]
  %v18 = vld [vmem:[%s1 + $0x8] sm:$0xf]
  %v19 = vld [vmem:[%s1 + $0xc] sm:$0xf]
  %v20 = vld [vmem:[%s1 + $0x10] sm:$0xf]
  %v21 = vld [vmem:[%s1 + $0x14] sm:$0xf]
  %v22 = vld [vmem:[%s2] sm:$0x1]
  %v24 = vlaneseq
  %v25 = vshrl.u32 %v24, 7
  %v26 = vsub.s32 0, %v25
  %v27 = vrot.slane %v22, %v26
  %v35 = vunpack.c.l.b16 %v16
  %v36 = vunpack.c.l.b16 %v17
  %v37 = vunpack.c.l.b16 %v18
  %v38 = vunpack.c.l.b16 %v19
  %v39 = vunpack.c.l.b16 %v20
  %v40 = vunpack.c.l.b16 %v21
  %v41 = vpack.c.b16 %v36, %v35
  %v42 = vpack.c.b16 %v38, %v37
  %v43 = vpack.c.b16 %v40, %v39
  %vm47 = vcmask 392192
  %v49 = vsel %vm47, %v15, 0
  %51 = vmatprep.subr.bf16.mxu0 0
  %52 = vmatpush1.bf16.msra.mxu0 0
  %53 = vmatprep.subr.bf16.mxu0 0
  %54 = vmatpush1.bf16.msra.mxu0 0
  %55 = vmatprep.subr.bf16.mxu0 0
  %56 = vmatpush1.bf16.msra.mxu0 0
  %57 = vmatprep.subr.bf16.mxu0 0
  %58 = vmatpush1.bf16.msra.mxu0 0
  %59 = vmatprep.subr.bf16.mxu0 0
  %60 = vmatpush1.bf16.msra.mxu0 0
  %61 = vmatprep.subr.bf16.mxu0 0
  %62 = vmatpush1.bf16.msra.mxu0 %v43
  %63 = vmatprep.subr.bf16.mxu0 0
  %64 = vmatpush1.bf16.msra.mxu0 %v42
  %65 = vmatprep.subr.bf16.mxu0 0
  %66 = vmatpush1.bf16.msra.mxu0 %v41
  %67 = vmatprep.subr.bf16.mxu0 0
  %68 = vmatpush2.bf16.msra.mxu0 0
  %69 = vmatprep.subr.bf16.mxu0 0
  %70 = vmatpush2.bf16.msra.mxu0 0
  %71 = vmatprep.subr.bf16.mxu0 0
  %72 = vmatpush2.bf16.msra.mxu0 0
  %73 = vmatprep.subr.bf16.mxu0 0
  %74 = vmatpush2.bf16.msra.mxu0 0
  %75 = vmatprep.subr.bf16.mxu0 0
  %76 = vmatpush2.bf16.msra.mxu0 0
  %77 = vmatprep.subr.bf16.mxu0 0
  %78 = vmatpush2.bf16.msra.mxu0 0
  %79 = vmatprep.subr.bf16.mxu0 0
  %80 = vmatpush2.bf16.msra.mxu0 0
  %81 = vmatprep.subr.bf16.mxu0 0
  %82 = vmatpush2.bf16.msra.mxu0 0
  %83 = vmatprep.mubr.bf16.mxu0 0
  %84 = vmatmul.mubr.bf16.gmra.mxu0 %v49
  %v85 = vpop.f32.mrf.mxu0
  %v86 = vadd.f32 %v27, %v85
  %v87 = vpop.f32.mrf.mxu0
  %v88 = vpop.f32.mrf.mxu0
  %v89 = vpop.f32.mrf.mxu0
  %90 = vdwg.mxu0
  %v91 = vmax.f32 %v86, 0.0
  %v92 = vpack.c.bf16 %v91, %v91
  %vm93 = vcmask 388096
  %94 = vst.msk [vmem:[%s3] sm:$0xf] %vm93, %v92
  // Predicated region
  $region14: #{road_classifier_forward.39} parent=0 // pred_check
    _
  $region15: #{road_classifier_forward.39} parent=0 // pred_check_branch
    %96 = sbr.rel (0) target = $region17
  $region16: #{road_classifier_forward.39} parent=0 // pred_region
    _
  $region17: #{road_classifier_forward.39} parent=0 // pred_fallthru
    _
  // Predicated region
  $region18: #{road_classifier_forward.39} parent=0 // pred_check
    _
  $region19: #{road_classifier_forward.39} parent=0 // pred_check_branch
    %98 = sbr.rel (0) target = $region21
  $region20: #{road_classifier_forward.39} parent=0 // pred_region
    _
  $region21: #{road_classifier_forward.39} parent=0 // pred_fallthru
    _

// kernel: road_classifier_forward.54
$region0: #{road_classifier_forward.54}
  #allocation0 [shape = 'u32[]', space=smem, size = 0x4, offset = 0x4, fixed_abs, tag = 'smem constant byte address 0x4 - core index']
  #allocation1 [shape = 'u32[144,128]{1,0:T(1,128)}', space=vmem, size = 0x12000, scoped, tag = 'internal scratch']
  %s0 = inlined_call_operand.vmem [shape: bf16[8,96], index: 0, kind: input, shape index: {}]
  %s1 = inlined_call_operand.vmem [shape: bf16[96,96], index: 1, kind: input, shape index: {}]
  %s2 = inlined_call_operand.vmem [shape: f32[1,96], index: 2, kind: input, shape index: {}]
  %s3 = inlined_call_operand.vmem [shape: bf16[8,96], index: 3, kind: output, shape index: {}]
  %s4 = sld [smem:[#allocation0]]
  $region22: #{road_classifier_forward.54} parent=0
    _
  %s6 = ssub.s32 1, %s4
  %s7 = scalar_select 0, %s6, %s4
  // Predicated region
  $region2: #{road_classifier_forward.54} parent=0 // pred_check
    _
  $region3: #{road_classifier_forward.54} parent=0 // pred_check_branch
    %9 = sbr.rel (0) target = $region5
  $region4: #{road_classifier_forward.54} parent=0 // pred_region
    _
  $region5: #{road_classifier_forward.54} parent=0 // pred_fallthru
    _
  // Predicated region
  $region6: #{road_classifier_forward.54} parent=0 // pred_check
    _
  $region7: #{road_classifier_forward.54} parent=0 // pred_check_branch
    %11 = sbr.rel (0) target = $region9
  $region8: #{road_classifier_forward.54} parent=0 // pred_region
    _
  $region9: #{road_classifier_forward.54} parent=0 // pred_fallthru
    _
  // Predicated region
  $region10: #{road_classifier_forward.54} parent=0 // pred_check
    _
  $region11: #{road_classifier_forward.54} parent=0 // pred_check_branch
    %13 = sbr.rel (0) target = $region13
  $region12: #{road_classifier_forward.54} parent=0 // pred_region
    _
  $region13: #{road_classifier_forward.54} parent=0 // pred_fallthru
    _
  %v15 = vld [vmem:[%s0] sm:$0xf]
  %v16 = vld [vmem:[%s1] sm:$0xf]
  %v17 = vld [vmem:[%s1 + $0x4] sm:$0xf]
  %v18 = vld [vmem:[%s1 + $0x8] sm:$0xf]
  %v19 = vld [vmem:[%s1 + $0xc] sm:$0xf]
  %v20 = vld [vmem:[%s1 + $0x10] sm:$0xf]
  %v21 = vld [vmem:[%s1 + $0x14] sm:$0xf]
  %v22 = vld [vmem:[%s1 + $0x18] sm:$0xf]
  %v23 = vld [vmem:[%s1 + $0x1c] sm:$0xf]
  %v24 = vld [vmem:[%s1 + $0x20] sm:$0xf]
  %v25 = vld [vmem:[%s1 + $0x24] sm:$0xf]
  %v26 = vld [vmem:[%s1 + $0x28] sm:$0xf]
  %v27 = vld [vmem:[%s1 + $0x2c] sm:$0xf]
  %v28 = vld [vmem:[%s2] sm:$0x1]
  %v30 = vlaneseq
  %v31 = vshrl.u32 %v30, 7
  %v32 = vsub.s32 0, %v31
  %v33 = vrot.slane %v28, %v32
  %v47 = vunpack.c.l.b16 %v16
  %v48 = vunpack.c.l.b16 %v17
  %v49 = vunpack.c.l.b16 %v18
  %v50 = vunpack.c.l.b16 %v19
  %v51 = vunpack.c.l.b16 %v20
  %v52 = vunpack.c.l.b16 %v21
  %v53 = vunpack.c.l.b16 %v22
  %v54 = vunpack.c.l.b16 %v23
  %v55 = vunpack.c.l.b16 %v24
  %v56 = vunpack.c.l.b16 %v25
  %v57 = vunpack.c.l.b16 %v26
  %v58 = vunpack.c.l.b16 %v27
  %v59 = vpack.c.b16 %v48, %v47
  %v60 = vpack.c.b16 %v50, %v49
  %v61 = vpack.c.b16 %v52, %v51
  %v62 = vpack.c.b16 %v54, %v53
  %v63 = vpack.c.b16 %v56, %v55
  %v64 = vpack.c.b16 %v58, %v57
  %vm71 = vcmask 785408
  %v73 = vsel %vm71, %v15, 0
  %75 = vmatprep.subr.bf16.mxu0 0
  %76 = vmatpush1.bf16.msra.mxu0 0
  %77 = vmatprep.subr.bf16.mxu0 0
  %78 = vmatpush1.bf16.msra.mxu0 0
  %79 = vmatprep.subr.bf16.mxu0 0
  %80 = vmatpush1.bf16.msra.mxu0 %v64
  %81 = vmatprep.subr.bf16.mxu0 0
  %82 = vmatpush1.bf16.msra.mxu0 %v63
  %83 = vmatprep.subr.bf16.mxu0 0
  %84 = vmatpush1.bf16.msra.mxu0 %v62
  %85 = vmatprep.subr.bf16.mxu0 0
  %86 = vmatpush1.bf16.msra.mxu0 %v61
  %87 = vmatprep.subr.bf16.mxu0 0
  %88 = vmatpush1.bf16.msra.mxu0 %v60
  %89 = vmatprep.subr.bf16.mxu0 0
  %90 = vmatpush1.bf16.msra.mxu0 %v59
  %91 = vmatprep.subr.bf16.mxu0 0
  %92 = vmatpush2.bf16.msra.mxu0 0
  %93 = vmatprep.subr.bf16.mxu0 0
  %94 = vmatpush2.bf16.msra.mxu0 0
  %95 = vmatprep.subr.bf16.mxu0 0
  %96 = vmatpush2.bf16.msra.mxu0 0
  %97 = vmatprep.subr.bf16.mxu0 0
  %98 = vmatpush2.bf16.msra.mxu0 0
  %99 = vmatprep.subr.bf16.mxu0 0
  %100 = vmatpush2.bf16.msra.mxu0 0
  %101 = vmatprep.subr.bf16.mxu0 0
  %102 = vmatpush2.bf16.msra.mxu0 0
  %103 = vmatprep.subr.bf16.mxu0 0
  %104 = vmatpush2.bf16.msra.mxu0 0
  %105 = vmatprep.subr.bf16.mxu0 0
  %106 = vmatpush2.bf16.msra.mxu0 0
  %107 = vmatprep.mubr.bf16.mxu0 0
  %108 = vmatmul.mubr.bf16.gmra.mxu0 %v73
  %v109 = vpop.f32.mrf.mxu0
  %v110 = vadd.f32 %v33, %v109
  %v111 = vpop.f32.mrf.mxu0
  %v112 = vpop.f32.mrf.mxu0
  %v113 = vpop.f32.mrf.mxu0
  %114 = vdwg.mxu0
  %v115 = vmax.f32 %v110, 0.0
  %v116 = vpack.c.bf16 %v115, %v115
  %vm117 = vcmask 781312
  %118 = vst.msk [vmem:[%s3] sm:$0xf] %vm117, %v116
  // Predicated region
  $region14: #{road_classifier_forward.54} parent=0 // pred_check
    _
  $region15: #{road_classifier_forward.54} parent=0 // pred_check_branch
    %120 = sbr.rel (0) target = $region17
  $region16: #{road_classifier_forward.54} parent=0 // pred_region
    _
  $region17: #{road_classifier_forward.54} parent=0 // pred_fallthru
    _
  // Predicated region
  $region18: #{road_classifier_forward.54} parent=0 // pred_check
    _
  $region19: #{road_classifier_forward.54} parent=0 // pred_check_branch
    %122 = sbr.rel (0) target = $region21
  $region20: #{road_classifier_forward.54} parent=0 // pred_region
    _
  $region21: #{road_classifier_forward.54} parent=0 // pred_fallthru
    _

// kernel: road_classifier_forward.55
$region0: #{road_classifier_forward.55}
  #allocation0 [shape = 'u32[]', space=smem, size = 0x4, offset = 0x4, fixed_abs, tag = 'smem constant byte address 0x4 - core index']
  #allocation1 [shape = 'u32[144,128]{1,0:T(1,128)}', space=vmem, size = 0x12000, scoped, tag = 'internal scratch']
  %s0 = inlined_call_operand.vmem [shape: bf16[2,1,192], index: 0, kind: input, shape index: {}]
  %s1 = inlined_call_operand.vmem [shape: bf16[192,1024], index: 1, kind: input, shape index: {}]
  %s2 = inlined_call_operand.vmem [shape: f32[1,1024], index: 2, kind: input, shape index: {}]
  %s3 = inlined_call_operand.vmem [shape: f32[1024,128], index: 3, kind: input, shape index: {}]
  %s4 = inlined_call_operand.vmem [shape: f32[1,128], index: 4, kind: input, shape index: {}]
  %s5 = inlined_call_operand.hbm [shape: f32[2,1,128], index: 5, kind: output, shape index: {}]
  %s6 = sld [smem:[#allocation0]]
  $region53: #{road_classifier_forward.55} parent=0
    _
  %s8 = ssub.s32 1, %s6
  %s9 = scalar_select 0, %s8, %s6
  $region1: #{road_classifier_forward.55} parent=0
    #allocation2 [shape = 'u8[1024]{0}', space=vmem, size = 0x400, scoped, tag = 'output window, operand 0']
    #allocation3 [shape = 's32[2]{0}', space=sflag, size = 0x8, scoped, tag = 'scoped memory for road_classifier_forward.55']
    %10 = vsyncpa [#allocation3], 0
    %s11 = scalar_lea.sflag [#allocation3], 1
    %12 = vsyncpa %s11, 0
    loop: start=0, step=1, limit=4
    $region2: #{road_classifier_forward.55} parent=1 // loop_pre_header
      _
    $region3: #{road_classifier_forward.55} parent=1 // loop_header
      %s14 = sphi 0, %s18
      %p15 = scmp.ge.s32.totalorder %s14, 4
      %s24 = sphi 0, %s26
      %s27 = sphi 0, %s24
      %s28 = sphi 0, %s27
      %s44 = sphi 0, %s28
      %s48 = sphi 0, %s48
      %s50 = sphi 0, %s48
      %s51 = sphi 0, %s50
      %s65 = sphi 0, %s51
      %s69 = sphi 0, %s69
      %s71 = sphi 0, %s69
      %s72 = sphi 0, %s71
      %s86 = sphi 0, %s72
      %s90 = sphi 0, %s90
      %s92 = sphi 0, %s90
      %s93 = sphi 0, %s92
      %s107 = sphi 0, %s93
      %s111 = sphi 0, %s111
      %s113 = sphi 0, %s111
      %s114 = sphi 0, %s113
      %s128 = sphi 0, %s114
      %s134 = sphi 0, %s136
      %s137 = sphi 0, %s134
      %s138 = sphi 0, %s137
      %s154 = sphi 0, %s138
    $region4: #{road_classifier_forward.55} parent=1 // loop_header_branch
      %17 = sbr.rel (%p15) target = $region8
    $region5: #{road_classifier_forward.55} parent=1 // loop_body
      %s19 = ssub.s32 %s14, 1
      %s20 = ssub.s32 %s14, 2
      %s21 = sadd.s32 %s14, 1
      %s22 = ssub.s32 %s14, %s21
      %p23 = scmp.eq.s32.totalorder %s22, 0
      %s25 = sadd.s32 %s24, 1
      %s26 = scalar_select %p23, %s24, %s25
      %p29 = pneg %p23
      %p30 = scmp.eq.s32.totalorder %s14, 1
      %p31 = por %p29, %p30
      %p32 = scmp.ne.s32.totalorder %s24, %s27
      %p33 = scmp.eq.s32.totalorder %s14, 0
      %p34 = por %p32, %p33
      %p35 = scmp.ne.s32.totalorder %s24, %s27
      %p36 = scmp.eq.s32.totalorder %s19, 1
      %p37 = por %p35, %p36
      %p38 = scmp.ne.s32.totalorder %s27, %s28
      %p39 = scmp.eq.s32.totalorder %s19, 0
      %p40 = por %p38, %p39
      %p41 = scmp.ne.s32.totalorder %s27, %s28
      %p42 = scmp.eq.s32.totalorder %s20, 1
      %p43 = por %p41, %p42
      %p45 = scmp.ne.s32.totalorder %s28, %s44
      %p46 = scmp.eq.s32.totalorder %s20, 0
      %p47 = por %p45, %p46
      %s49 = sadd.s32 %s48, 1
      %p52 = scmp.eq.s32.totalorder %s14, 1
      %p53 = scmp.ne.s32.totalorder %s48, %s50
      %p54 = scmp.eq.s32.totalorder %s14, 0
      %p55 = por %p53, %p54
      %p56 = scmp.ne.s32.totalorder %s48, %s50
      %p57 = scmp.eq.s32.totalorder %s19, 1
      %p58 = por %p56, %p57
      %p59 = scmp.ne.s32.totalorder %s50, %s51
      %p60 = scmp.eq.s32.totalorder %s19, 0
      %p61 = por %p59, %p60
      %p62 = scmp.ne.s32.totalorder %s50, %s51
      %p63 = scmp.eq.s32.totalorder %s20, 1
      %p64 = por %p62, %p63
      %p66 = scmp.ne.s32.totalorder %s51, %s65
      %p67 = scmp.eq.s32.totalorder %s20, 0
      %p68 = por %p66, %p67
      %s70 = sadd.s32 %s69, 1
      %p73 = scmp.eq.s32.totalorder %s14, 1
      %p74 = scmp.ne.s32.totalorder %s69, %s71
      %p75 = scmp.eq.s32.totalorder %s14, 0
      %p76 = por %p74, %p75
      %p77 = scmp.ne.s32.totalorder %s69, %s71
      %p78 = scmp.eq.s32.totalorder %s19, 1
      %p79 = por %p77, %p78
      %p80 = scmp.ne.s32.totalorder %s71, %s72
      %p81 = scmp.eq.s32.totalorder %s19, 0
      %p82 = por %p80, %p81
      %p83 = scmp.ne.s32.totalorder %s71, %s72
      %p84 = scmp.eq.s32.totalorder %s20, 1
      %p85 = por %p83, %p84
      %p87 = scmp.ne.s32.totalorder %s72, %s86
      %p88 = scmp.eq.s32.totalorder %s20, 0
      %p89 = por %p87, %p88
      %s91 = sadd.s32 %s90, 1
      %p94 = scmp.eq.s32.totalorder %s14, 1
      %p95 = scmp.ne.s32.totalorder %s90, %s92
      %p96 = scmp.eq.s32.totalorder %s14, 0
      %p97 = por %p95, %p96
      %p98 = scmp.ne.s32.totalorder %s90, %s92
      %p99 = scmp.eq.s32.totalorder %s19, 1
      %p100 = por %p98, %p99
      %p101 = scmp.ne.s32.totalorder %s92, %s93
      %p102 = scmp.eq.s32.totalorder %s19, 0
      %p103 = por %p101, %p102
      %p104 = scmp.ne.s32.totalorder %s92, %s93
      %p105 = scmp.eq.s32.totalorder %s20, 1
      %p106 = por %p104, %p105
      %p108 = scmp.ne.s32.totalorder %s93, %s107
      %p109 = scmp.eq.s32.totalorder %s20, 0
      %p110 = por %p108, %p109
      %s112 = sadd.s32 %s111, 1
      %p115 = scmp.eq.s32.totalorder %s14, 1
      %p116 = scmp.ne.s32.totalorder %s111, %s113
      %p117 = scmp.eq.s32.totalorder %s14, 0
      %p118 = por %p116, %p117
      %p119 = scmp.ne.s32.totalorder %s111, %s113
      %p120 = scmp.eq.s32.totalorder %s19, 1
      %p121 = por %p119, %p120
      %p122 = scmp.ne.s32.totalorder %s113, %s114
      %p123 = scmp.eq.s32.totalorder %s19, 0
      %p124 = por %p122, %p123
      %p125 = scmp.ne.s32.totalorder %s113, %s114
      %p126 = scmp.eq.s32.totalorder %s20, 1
      %p127 = por %p125, %p126
      %p129 = scmp.ne.s32.totalorder %s114, %s128
      %p130 = scmp.eq.s32.totalorder %s20, 0
      %p131 = por %p129, %p130
      %s132 = ssub.s32 %s14, %s21
      %p133 = scmp.eq.s32.totalorder %s132, 0
      %s135 = sadd.s32 %s134, 1
      %s136 = scalar_select %p133, %s134, %s135
      %p139 = pneg %p133
      %p140 = scmp.eq.s32.totalorder %s14, 1
      %p141 = por %p139, %p140
      %p142 = scmp.ne.s32.totalorder %s134, %s137
      %p143 = scmp.eq.s32.totalorder %s14, 0
      %p144 = por %p142, %p143
      %p145 = scmp.ne.s32.totalorder %s134, %s137
      %p146 = scmp.eq.s32.totalorder %s19, 1
      %p147 = por %p145, %p146
      %p148 = scmp.ne.s32.totalorder %s137, %s138
      %p149 = scmp.eq.s32.totalorder %s19, 0
      %p150 = por %p148, %p149
      %p151 = scmp.ne.s32.totalorder %s137, %s138
      %p152 = scmp.eq.s32.totalorder %s20, 1
      %p153 = por %p151, %p152
      %p155 = scmp.ne.s32.totalorder %s138, %s154
      %p156 = scmp.eq.s32.totalorder %s20, 0
      %p157 = por %p155, %p156
      %p158 = scmp.le.s32.totalorder 1, %s14
      %p159 = scmp.lt.s32.totalorder %s14, 3
      %p160 = pnand %p158, %p159
      %p161 = pneg %p160
      // Predicated region
      $region9: #{road_classifier_forward.55} parent=5 // pred_check
        _
      $region10: #{road_classifier_forward.55} parent=5 // pred_check_branch
        %163 = sbr.rel (%p160) target = $region12
      $region11: #{road_classifier_forward.55} parent=5 // pred_region
        %s164 = ssub.s32 %s14, 1
        // Predicated region
        $region13: #{road_classifier_forward.55} parent=11 // pred_check
          %p165 = pneg %p61
        $region14: #{road_classifier_forward.55} parent=11 // pred_check_branch
          %167 = sbr.rel (%p165) target = $region16
        $region15: #{road_classifier_forward.55} parent=11 // pred_region
          _
        $region16: #{road_classifier_forward.55} parent=11 // pred_fallthru
          _
        // Predicated region
        $region17: #{road_classifier_forward.55} parent=11 // pred_check
          %p168 = pneg %p82
        $region18: #{road_classifier_forward.55} parent=11 // pred_check_branch
          %170 = sbr.rel (%p168) target = $region20
        $region19: #{road_classifier_forward.55} parent=11 // pred_region
          _
        $region20: #{road_classifier_forward.55} parent=11 // pred_fallthru
          _
        // Predicated region
        $region21: #{road_classifier_forward.55} parent=11 // pred_check
          %p171 = pneg %p103
        $region22: #{road_classifier_forward.55} parent=11 // pred_check_branch
          %173 = sbr.rel (%p171) target = $region24
        $region23: #{road_classifier_forward.55} parent=11 // pred_region
          _
        $region24: #{road_classifier_forward.55} parent=11 // pred_fallthru
          _
        // Predicated region
        $region25: #{road_classifier_forward.55} parent=11 // pred_check
          %p174 = pneg %p124
        $region26: #{road_classifier_forward.55} parent=11 // pred_check_branch
          %176 = sbr.rel (%p174) target = $region28
        $region27: #{road_classifier_forward.55} parent=11 // pred_region
          _
        $region28: #{road_classifier_forward.55} parent=11 // pred_fallthru
          _
      $region12: #{road_classifier_forward.55} parent=5 // pred_fallthru
        _
      %p177 = scmp.lt.s32.totalorder %s14, 2
      // Predicated region
      $region29: #{road_classifier_forward.55} parent=5 // pred_check
        %p178 = pneg %p177
      $region30: #{road_classifier_forward.55} parent=5 // pred_check_branch
        %180 = sbr.rel (%p178) target = $region32
      $region31: #{road_classifier_forward.55} parent=5 // pred_region
        // Predicated region
        $region33: #{road_classifier_forward.55} parent=31 // pred_check
          %p181 = pneg %p34
        $region34: #{road_classifier_forward.55} parent=31 // pred_check_branch
          %183 = sbr.rel (%p181) target = $region36
        $region35: #{road_classifier_forward.55} parent=31 // pred_region
          %p184 = scmp.lt.s32.totalorder %s14, 1
          %s185 = scalar_select %p184, %s14, 1
          %s186 = smul.addr %s185, 2
          %s187 = scalar_lea.vmem %s0, %s186
        $region36: #{road_classifier_forward.55} parent=31 // pred_fallthru
          _
      $region32: #{road_classifier_forward.55} parent=5 // pred_fallthru
        _
      %p188 = scmp.le.s32.totalorder 1, %s14
      %p189 = scmp.lt.s32.totalorder %s14, 3
      %p190 = pnand %p188, %p189
      %p191 = pneg %p190
      // Predicated region
      $region37: #{road_classifier_forward.55} parent=5 // pred_check
        _
      $region38: #{road_classifier_forward.55} parent=5 // pred_check_branch
        %193 = sbr.rel (%p190) target = $region40
      $region39: #{road_classifier_forward.55} parent=5 // pred_region
        %s194 = ssub.s32 %s14, 1
        %p195 = scmp.lt.s32.totalorder %s19, 1
        %s196 = scalar_select %p195, %s19, 1
        %s197 = smul.addr %s196, 2
        %s198 = scalar_lea.vmem %s0, %s197
        %p199 = pneg %p40
        %p200 = pneg %p37
        %p201 = pneg %p61
        %p202 = pneg %p58
        %p203 = pneg %p82
        %p204 = pneg %p79
        %p205 = pneg %p103
        %p206 = pneg %p100
        %p207 = pneg %p124
        %p208 = pneg %p121
        %p209 = pneg %p150
        %p210 = pneg %p147
        %s211 = sand.u32 %s137, 1
        %s212 = scalar_lea.sflag [#allocation3], %s211
        %s213 = sand.u32 %s137, 1
        %s214 = scalar_lea.vmem [#allocation2], %s213
        %p215 = scmp.lt.s32.totalorder %s19, 1
        %s216 = scalar_select %p215, %s19, 1
        %s217 = smul.addr %s216, 2
        %s218 = scalar_lea.vmem %s0, %s217
        %v220 = vld [vmem:[%s218] sm:$0x3]
        %v221 = vld [vmem:[%s1] sm:$0xff]
        %v222 = vld [vmem:[%s1 + $0x8] sm:$0xff]
        %v223 = vld [vmem:[%s1 + $0x10] sm:$0xff]
        %v224 = vld [vmem:[%s1 + $0x18] sm:$0xff]
        %v225 = vld [vmem:[%s1 + $0x20] sm:$0xff]
        %v226 = vld [vmem:[%s1 + $0x28] sm:$0xff]
        %v227 = vld [vmem:[%s1 + $0x30] sm:$0xff]
        %v228 = vld [vmem:[%s1 + $0x38] sm:$0xff]
        %v229 = vld [vmem:[%s1 + $0x40] sm:$0xff]
        %v230 = vld [vmem:[%s1 + $0x48] sm:$0xff]
        %v231 = vld [vmem:[%s1 + $0x50] sm:$0xff]
        %v232 = vld [vmem:[%s1 + $0x58] sm:$0xff]
        %v233 = vld [vmem:[%s1 + $0x60] sm:$0xff]
        %v234 = vld [vmem:[%s1 + $0x68] sm:$0xff]
        %v235 = vld [vmem:[%s1 + $0x70] sm:$0xff]
        %v236 = vld [vmem:[%s1 + $0x78] sm:$0xff]
        %v237 = vld [vmem:[%s1 + $0x80] sm:$0xff]
        %v238 = vld [vmem:[%s1 + $0x88] sm:$0xff]
        %v239 = vld [vmem:[%s1 + $0x90] sm:$0xff]
        %v240 = vld [vmem:[%s1 + $0x98] sm:$0xff]
        %v241 = vld [vmem:[%s1 + $0xa0] sm:$0xff]
        %v242 = vld [vmem:[%s1 + $0xa8] sm:$0xff]
        %v243 = vld [vmem:[%s1 + $0xb0] sm:$0xff]
        %v244 = vld [vmem:[%s1 + $0xb8] sm:$0xff]
        %v245 = vld [vmem:[%s1 + $0xc0] sm:$0xff]
        %v246 = vld [vmem:[%s1 + $0xc8] sm:$0xff]
        %v247 = vld [vmem:[%s1 + $0xd0] sm:$0xff]
        %v248 = vld [vmem:[%s1 + $0xd8] sm:$0xff]
        %v249 = vld [vmem:[%s1 + $0xe0] sm:$0xff]
        %v250 = vld [vmem:[%s1 + $0xe8] sm:$0xff]
        %v251 = vld [vmem:[%s1 + $0xf0] sm:$0xff]
        %v252 = vld [vmem:[%s1 + $0xf8] sm:$0xff]
        %v253 = vld [vmem:[%s1 + $0x100] sm:$0xff]
        %v254 = vld [vmem:[%s1 + $0x108] sm:$0xff]
        %v255 = vld [vmem:[%s1 + $0x110] sm:$0xff]
        %v256 = vld [vmem:[%s1 + $0x118] sm:$0xff]
        %v257 = vld [vmem:[%s1 + $0x120] sm:$0xff]
        %v258 = vld [vmem:[%s1 + $0x128] sm:$0xff]
        %v259 = vld [vmem:[%s1 + $0x130] sm:$0xff]
        %v260 = vld [vmem:[%s1 + $0x138] sm:$0xff]
        %v261 = vld [vmem:[%s1 + $0x140] sm:$0xff]
        %v262 = vld [vmem:[%s1 + $0x148] sm:$0xff]
        %v263 = vld [vmem:[%s1 + $0x150] sm:$0xff]
        %v264 = vld [vmem:[%s1 + $0x158] sm:$0xff]
        %v265 = vld [vmem:[%s1 + $0x160] sm:$0xff]
        %v266 = vld [vmem:[%s1 + $0x168] sm:$0xff]
        %v267 = vld [vmem:[%s1 + $0x170] sm:$0xff]
        %v268 = vld [vmem:[%s1 + $0x178] sm:$0xff]
        %v269 = vld [vmem:[%s1 + $0x180] sm:$0xff]
        %v270 = vld [vmem:[%s1 + $0x188] sm:$0xff]
        %v271 = vld [vmem:[%s1 + $0x190] sm:$0xff]
        %v272 = vld [vmem:[%s1 + $0x198] sm:$0xff]
        %v273 = vld [vmem:[%s1 + $0x1a0] sm:$0xff]
        %v274 = vld [vmem:[%s1 + $0x1a8] sm:$0xff]
        %v275 = vld [vmem:[%s1 + $0x1b0] sm:$0xff]
        %v276 = vld [vmem:[%s1 + $0x1b8] sm:$0xff]
        %v277 = vld [vmem:[%s1 + $0x1c0] sm:$0xff]
        %v278 = vld [vmem:[%s1 + $0x1c8] sm:$0xff]
        %v279 = vld [vmem:[%s1 + $0x1d0] sm:$0xff]
        %v280 = vld [vmem:[%s1 + $0x1d8] sm:$0xff]
        %v281 = vld [vmem:[%s1 + $0x1e0] sm:$0xff]
        %v282 = vld [vmem:[%s1 + $0x1e8] sm:$0xff]
        %v283 = vld [vmem:[%s1 + $0x1f0] sm:$0xff]
        %v284 = vld [vmem:[%s1 + $0x1f8] sm:$0xff]
        %v285 = vld [vmem:[%s1 + $0x200] sm:$0xff]
        %v286 = vld [vmem:[%s1 + $0x208] sm:$0xff]
        %v287 = vld [vmem:[%s1 + $0x210] sm:$0xff]
        %v288 = vld [vmem:[%s1 + $0x218] sm:$0xff]
        %v289 = vld [vmem:[%s1 + $0x220] sm:$0xff]
        %v290 = vld [vmem:[%s1 + $0x228] sm:$0xff]
        %v291 = vld [vmem:[%s1 + $0x230] sm:$0xff]
        %v292 = vld [vmem:[%s1 + $0x238] sm:$0xff]
        %v293 = vld [vmem:[%s1 + $0x240] sm:$0xff]
        %v294 = vld [vmem:[%s1 + $0x248] sm:$0xff]
        %v295 = vld [vmem:[%s1 + $0x250] sm:$0xff]
        %v296 = vld [vmem:[%s1 + $0x258] sm:$0xff]
        %v297 = vld [vmem:[%s1 + $0x260] sm:$0xff]
        %v298 = vld [vmem:[%s1 + $0x268] sm:$0xff]
        %v299 = vld [vmem:[%s1 + $0x270] sm:$0xff]
        %v300 = vld [vmem:[%s1 + $0x278] sm:$0xff]
        %v301 = vld [vmem:[%s1 + $0x280] sm:$0xff]
        %v302 = vld [vmem:[%s1 + $0x288] sm:$0xff]
        %v303 = vld [vmem:[%s1 + $0x290] sm:$0xff]
        %v304 = vld [vmem:[%s1 + $0x298] sm:$0xff]
        %v305 = vld [vmem:[%s1 + $0x2a0] sm:$0xff]
        %v306 = vld [vmem:[%s1 + $0x2a8] sm:$0xff]
        %v307 = vld [vmem:[%s1 + $0x2b0] sm:$0xff]
        %v308 = vld [vmem:[%s1 + $0x2b8] sm:$0xff]
        %v309 = vld [vmem:[%s1 + $0x2c0] sm:$0xff]
        %v310 = vld [vmem:[%s1 + $0x2c8] sm:$0xff]
        %v311 = vld [vmem:[%s1 + $0x2d0] sm:$0xff]
        %v312 = vld [vmem:[%s1 + $0x2d8] sm:$0xff]
        %v313 = vld [vmem:[%s1 + $0x2e0] sm:$0xff]
        %v314 = vld [vmem:[%s1 + $0x2e8] sm:$0xff]
        %v315 = vld [vmem:[%s1 + $0x2f0] sm:$0xff]
        %v316 = vld [vmem:[%s1 + $0x2f8] sm:$0xff]
        %v317 = vld [vmem:[%s2] sm:$0xff]
        %v320 = vunpack.c.l.s4 1966171168
        %v321 = vunpack.c.0.s8 %v320
        %v322 = vlaneseq
        %v323 = vshrl.u32 %v322, 7
        %v324 = vsub.s32 %v321, %v323
        %v325 = vrot.slane %v220, %v324
        %v326 = vcombine.high %v325, %v325
        %v328 = vunpack.c.l.s4 1966171168
        %v329 = vunpack.c.0.s8 %v328
        %v330 = vlaneseq
        %v331 = vshrl.u32 %v330, 7
        %v332 = vsub.s32 %v329, %v331
        %v333 = vrot.slane %v325, %v332
        %v335 = vunpack.c.l.s4 1966171168
        %v336 = vunpack.c.0.s8 %v335
        %v337 = vlaneseq
        %v338 = vshrl.u32 %v337, 7
        %v339 = vsub.s32 %v336, %v338
        %v340 = vrot.slane %v326, %v339
        %v438 = vunpack.c.l.b16 %v221
        %v439 = vunpack.c.h.b16 %v221
        %v440 = vunpack.c.l.b16 %v222
        %v441 = vunpack.c.h.b16 %v222
        %v442 = vunpack.c.l.b16 %v223
        %v443 = vunpack.c.h.b16 %v223
        %v444 = vunpack.c.l.b16 %v224
        %v445 = vunpack.c.h.b16 %v224
        %v446 = vunpack.c.l.b16 %v225
        %v447 = vunpack.c.h.b16 %v225
        %v448 = vunpack.c.l.b16 %v226
        %v449 = vunpack.c.h.b16 %v226
        %v450 = vunpack.c.l.b16 %v227
        %v451 = vunpack.c.h.b16 %v227
        %v452 = vunpack.c.l.b16 %v228
        %v453 = vunpack.c.h.b16 %v228
        %v454 = vunpack.c.l.b16 %v229
        %v455 = vunpack.c.h.b16 %v229
        %v456 = vunpack.c.l.b16 %v230
        %v457 = vunpack.c.h.b16 %v230
        %v458 = vunpack.c.l.b16 %v231
        %v459 = vunpack.c.h.b16 %v231
        %v460 = vunpack.c.l.b16 %v232
        %v461 = vunpack.c.h.b16 %v232
        %v462 = vunpack.c.l.b16 %v233
        %v463 = vunpack.c.h.b16 %v233
        %v464 = vunpack.c.l.b16 %v234
        %v465 = vunpack.c.h.b16 %v234
        %v466 = vunpack.c.l.b16 %v235
        %v467 = vunpack.c.h.b16 %v235
        %v468 = vunpack.c.l.b16 %v236
        %v469 = vunpack.c.h.b16 %v236
        %v470 = vunpack.c.l.b16 %v237
        %v471 = vunpack.c.h.b16 %v237
        %v472 = vunpack.c.l.b16 %v238
        %v473 = vunpack.c.h.b16 %v238
        %v474 = vunpack.c.l.b16 %v239
        %v475 = vunpack.c.h.b16 %v239
        %v476 = vunpack.c.l.b16 %v240
        %v477 = vunpack.c.h.b16 %v240
        %v478 = vunpack.c.l.b16 %v241
        %v479 = vunpack.c.h.b16 %v241
        %v480 = vunpack.c.l.b16 %v242
        %v481 = vunpack.c.h.b16 %v242
        %v482 = vunpack.c.l.b16 %v243
        %v483 = vunpack.c.h.b16 %v243
        %v484 = vunpack.c.l.b16 %v244
        %v485 = vunpack.c.h.b16 %v244
        %v486 = vunpack.c.l.b16 %v245
        %v487 = vunpack.c.h.b16 %v245
        %v488 = vunpack.c.l.b16 %v246
        %v489 = vunpack.c.h.b16 %v246
        %v490 = vunpack.c.l.b16 %v247
        %v491 = vunpack.c.h.b16 %v247
        %v492 = vunpack.c.l.b16 %v248
        %v493 = vunpack.c.h.b16 %v248
        %v494 = vunpack.c.l.b16 %v249
        %v495 = vunpack.c.h.b16 %v249
        %v496 = vunpack.c.l.b16 %v250
        %v497 = vunpack.c.h.b16 %v250
        %v498 = vunpack.c.l.b16 %v251
        %v499 = vunpack.c.h.b16 %v251
        %v500 = vunpack.c.l.b16 %v252
        %v501 = vunpack.c.h.b16 %v252
        %v502 = vunpack.c.l.b16 %v253
        %v503 = vunpack.c.h.b16 %v253
        %v504 = vunpack.c.l.b16 %v254
        %v505 = vunpack.c.h.b16 %v254
        %v506 = vunpack.c.l.b16 %v255
        %v507 = vunpack.c.h.b16 %v255
        %v508 = vunpack.c.l.b16 %v256
        %v509 = vunpack.c.h.b16 %v256
        %v510 = vunpack.c.l.b16 %v257
        %v511 = vunpack.c.h.b16 %v257
        %v512 = vunpack.c.l.b16 %v258
        %v513 = vunpack.c.h.b16 %v258
        %v514 = vunpack.c.l.b16 %v259
        %v515 = vunpack.c.h.b16 %v259
        %v516 = vunpack.c.l.b16 %v260
        %v517 = vunpack.c.h.b16 %v260
        %v518 = vunpack.c.l.b16 %v261
        %v519 = vunpack.c.h.b16 %v261
        %v520 = vunpack.c.l.b16 %v262
        %v521 = vunpack.c.h.b16 %v262
        %v522 = vunpack.c.l.b16 %v263
        %v523 = vunpack.c.h.b16 %v263
        %v524 = vunpack.c.l.b16 %v264
        %v525 = vunpack.c.h.b16 %v264
        %v526 = vunpack.c.l.b16 %v265
        %v527 = vunpack.c.h.b16 %v265
        %v528 = vunpack.c.l.b16 %v266
        %v529 = vunpack.c.h.b16 %v266
        %v530 = vunpack.c.l.b16 %v267
        %v531 = vunpack.c.h.b16 %v267
        %v532 = vunpack.c.l.b16 %v268
        %v533 = vunpack.c.h.b16 %v268
        %v534 = vunpack.c.l.b16 %v269
        %v535 = vunpack.c.h.b16 %v269
        %v536 = vunpack.c.l.b16 %v270
        %v537 = vunpack.c.h.b16 %v270
        %v538 = vunpack.c.l.b16 %v271
        %v539 = vunpack.c.h.b16 %v271
        %v540 = vunpack.c.l.b16 %v272
        %v541 = vunpack.c.h.b16 %v272
        %v542 = vunpack.c.l.b16 %v273
        %v543 = vunpack.c.h.b16 %v273
        %v544 = vunpack.c.l.b16 %v274
        %v545 = vunpack.c.h.b16 %v274
        %v546 = vunpack.c.l.b16 %v275
        %v547 = vunpack.c.h.b16 %v275
        %v548 = vunpack.c.l.b16 %v276
        %v549 = vunpack.c.h.b16 %v276
        %v550 = vunpack.c.l.b16 %v277
        %v551 = vunpack.c.h.b16 %v277
        %v552 = vunpack.c.l.b16 %v278
        %v553 = vunpack.c.h.b16 %v278
        %v554 = vunpack.c.l.b16 %v279
        %v555 = vunpack.c.h.b16 %v279
        %v556 = vunpack.c.l.b16 %v280
        %v557 = vunpack.c.h.b16 %v280
        %v558 = vunpack.c.l.b16 %v281
        %v559 = vunpack.c.h.b16 %v281
        %v560 = vunpack.c.l.b16 %v282
        %v561 = vunpack.c.h.b16 %v282
        %v562 = vunpack.c.l.b16 %v283
        %v563 = vunpack.c.h.b16 %v283
        %v564 = vunpack.c.l.b16 %v284
        %v565 = vunpack.c.h.b16 %v284
        %v566 = vunpack.c.l.b16 %v285
        %v567 = vunpack.c.h.b16 %v285
        %v568 = vunpack.c.l.b16 %v286
        %v569 = vunpack.c.h.b16 %v286
        %v570 = vunpack.c.l.b16 %v287
        %v571 = vunpack.c.h.b16 %v287
        %v572 = vunpack.c.l.b16 %v288
        %v573 = vunpack.c.h.b16 %v288
        %v574 = vunpack.c.l.b16 %v289
        %v575 = vunpack.c.h.b16 %v289
        %v576 = vunpack.c.l.b16 %v290
        %v577 = vunpack.c.h.b16 %v290
        %v578 = vunpack.c.l.b16 %v291
        %v579 = vunpack.c.h.b16 %v291
        %v580 = vunpack.c.l.b16 %v292
        %v581 = vunpack.c.h.b16 %v292
        %v582 = vunpack.c.l.b16 %v293
        %v583 = vunpack.c.h.b16 %v293
        %v584 = vunpack.c.l.b16 %v294
        %v585 = vunpack.c.h.b16 %v294
        %v586 = vunpack.c.l.b16 %v295
        %v587 = vunpack.c.h.b16 %v295
        %v588 = vunpack.c.l.b16 %v296
        %v589 = vunpack.c.h.b16 %v296
        %v590 = vunpack.c.l.b16 %v297
        %v591 = vunpack.c.h.b16 %v297
        %v592 = vunpack.c.l.b16 %v298
        %v593 = vunpack.c.h.b16 %v298
        %v594 = vunpack.c.l.b16 %v299
        %v595 = vunpack.c.h.b16 %v299
        %v596 = vunpack.c.l.b16 %v300
        %v597 = vunpack.c.h.b16 %v300
        %v598 = vunpack.c.l.b16 %v301
        %v599 = vunpack.c.h.b16 %v301
        %v600 = vunpack.c.l.b16 %v302
        %v601 = vunpack.c.h.b16 %v302
        %v602 = vunpack.c.l.b16 %v303
        %v603 = vunpack.c.h.b16 %v303
        %v604 = vunpack.c.l.b16 %v304
        %v605 = vunpack.c.h.b16 %v304
        %v606 = vunpack.c.l.b16 %v305
        %v607 = vunpack.c.h.b16 %v305
        %v608 = vunpack.c.l.b16 %v306
        %v609 = vunpack.c.h.b16 %v306
        %v610 = vunpack.c.l.b16 %v307
        %v611 = vunpack.c.h.b16 %v307
        %v612 = vunpack.c.l.b16 %v308
        %v613 = vunpack.c.h.b16 %v308
        %v614 = vunpack.c.l.b16 %v309
        %v615 = vunpack.c.h.b16 %v309
        %v616 = vunpack.c.l.b16 %v310
        %v617 = vunpack.c.h.b16 %v310
        %v618 = vunpack.c.l.b16 %v311
        %v619 = vunpack.c.h.b16 %v311
        %v620 = vunpack.c.l.b16 %v312
        %v621 = vunpack.c.h.b16 %v312
        %v622 = vunpack.c.l.b16 %v313
        %v623 = vunpack.c.h.b16 %v313
        %v624 = vunpack.c.l.b16 %v314
        %v625 = vunpack.c.h.b16 %v314
        %v626 = vunpack.c.l.b16 %v315
        %v627 = vunpack.c.h.b16 %v315
        %v628 = vunpack.c.l.b16 %v316
        %v629 = vunpack.c.h.b16 %v316
        %v630 = vpack.c.b16 %v446, %v438
        %v631 = vpack.c.b16 %v447, %v439
        %v632 = vpack.c.b16 %v448, %v440
        %v633 = vpack.c.b16 %v449, %v441
        %v634 = vpack.c.b16 %v450, %v442
        %v635 = vpack.c.b16 %v451, %v443
        %v636 = vpack.c.b16 %v452, %v444
        %v637 = vpack.c.b16 %v453, %v445
        %v638 = vpack.c.b16 %v462, %v454
        %v639 = vpack.c.b16 %v463, %v455
        %v640 = vpack.c.b16 %v464, %v456
        %v641 = vpack.c.b16 %v465, %v457
        %v642 = vpack.c.b16 %v466, %v458
        %v643 = vpack.c.b16 %v467, %v459
        %v644 = vpack.c.b16 %v468, %v460
        %v645 = vpack.c.b16 %v469, %v461
        %v646 = vpack.c.b16 %v478, %v470
        %v647 = vpack.c.b16 %v479, %v471
        %v648 = vpack.c.b16 %v480, %v472
        %v649 = vpack.c.b16 %v481, %v473
        %v650 = vpack.c.b16 %v482, %v474
        %v651 = vpack.c.b16 %v483, %v475
        %v652 = vpack.c.b16 %v484, %v476
        %v653 = vpack.c.b16 %v485, %v477
        %v654 = vpack.c.b16 %v494, %v486
        %v655 = vpack.c.b16 %v495, %v487
        %v656 = vpack.c.b16 %v496, %v488
        %v657 = vpack.c.b16 %v497, %v489
        %v658 = vpack.c.b16 %v498, %v490
        %v659 = vpack.c.b16 %v499, %v491
        %v660 = vpack.c.b16 %v500, %v492
        %v661 = vpack.c.b16 %v501, %v493
        %v662 = vpack.c.b16 %v510, %v502
        %v663 = vpack.c.b16 %v511, %v503
        %v664 = vpack.c.b16 %v512, %v504
        %v665 = vpack.c.b16 %v513, %v505
        %v666 = vpack.c.b16 %v514, %v506
        %v667 = vpack.c.b16 %v515, %v507
        %v668 = vpack.c.b16 %v516, %v508
        %v669 = vpack.c.b16 %v517, %v509
        %v670 = vpack.c.b16 %v526, %v518
        %v671 = vpack.c.b16 %v527, %v519
        %v672 = vpack.c.b16 %v528, %v520
        %v673 = vpack.c.b16 %v529, %v521
        %v674 = vpack.c.b16 %v530, %v522
        %v675 = vpack.c.b16 %v531, %v523
        %v676 = vpack.c.b16 %v532, %v524
        %v677 = vpack.c.b16 %v533, %v525
        %v678 = vpack.c.b16 %v542, %v534
        %v679 = vpack.c.b16 %v543, %v535
        %v680 = vpack.c.b16 %v544, %v536
        %v681 = vpack.c.b16 %v545, %v537
        %v682 = vpack.c.b16 %v546, %v538
        %v683 = vpack.c.b16 %v547, %v539
        %v684 = vpack.c.b16 %v548, %v540
        %v685 = vpack.c.b16 %v549, %v541
        %v686 = vpack.c.b16 %v558, %v550
        %v687 = vpack.c.b16 %v559, %v551
        %v688 = vpack.c.b16 %v560, %v552
        %v689 = vpack.c.b16 %v561, %v553
        %v690 = vpack.c.b16 %v562, %v554
        %v691 = vpack.c.b16 %v563, %v555
        %v692 = vpack.c.b16 %v564, %v556
        %v693 = vpack.c.b16 %v565, %v557
        %v694 = vpack.c.b16 %v574, %v566
        %v695 = vpack.c.b16 %v575, %v567
        %v696 = vpack.c.b16 %v576, %v568
        %v697 = vpack.c.b16 %v577, %v569
        %v698 = vpack.c.b16 %v578, %v570
        %v699 = vpack.c.b16 %v579, %v571
        %v700 = vpack.c.b16 %v580, %v572
        %v701 = vpack.c.b16 %v581, %v573
        %v702 = vpack.c.b16 %v590, %v582
        %v703 = vpack.c.b16 %v591, %v583
        %v704 = vpack.c.b16 %v592, %v584
        %v705 = vpack.c.b16 %v593, %v585
        %v706 = vpack.c.b16 %v594, %v586
        %v707 = vpack.c.b16 %v595, %v587
        %v708 = vpack.c.b16 %v596, %v588
        %v709 = vpack.c.b16 %v597, %v589
        %v710 = vpack.c.b16 %v606, %v598
        %v711 = vpack.c.b16 %v607, %v599
        %v712 = vpack.c.b16 %v608, %v600
        %v713 = vpack.c.b16 %v609, %v601
        %v714 = vpack.c.b16 %v610, %v602
        %v715 = vpack.c.b16 %v611, %v603
        %v716 = vpack.c.b16 %v612, %v604
        %v717 = vpack.c.b16 %v613, %v605
        %v718 = vpack.c.b16 %v622, %v614
        %v719 = vpack.c.b16 %v623, %v615
        %v720 = vpack.c.b16 %v624, %v616
        %v721 = vpack.c.b16 %v625, %v617
        %v722 = vpack.c.b16 %v626, %v618
        %v723 = vpack.c.b16 %v627, %v619
        %v724 = vpack.c.b16 %v628, %v620
        %v725 = vpack.c.b16 %v629, %v621
        %v823 = vlaneseq
        %v824 = vshrl.u32 %v823, 7
        %v825 = vsub.s32 0, %v824
        %v826 = vrot.slane %v317, %v825
        %v827 = vlaneseq
        %v828 = vshrl.u32 %v827, 7
        %v829 = vsub.s32 1, %v828
        %v830 = vrot.slane %v317, %v829
        %v831 = vlaneseq
        %v832 = vshrl.u32 %v831, 7
        %v833 = vsub.s32 2, %v832
        %v834 = vrot.slane %v317, %v833
        %v835 = vlaneseq
        %v836 = vshrl.u32 %v835, 7
        %v837 = vsub.s32 3, %v836
        %v838 = vrot.slane %v317, %v837
        %v839 = vlaneseq
        %v840 = vshrl.u32 %v839, 7
        %v841 = vsub.s32 4, %v840
        %v842 = vrot.slane %v317, %v841
        %v843 = vlaneseq
        %v844 = vshrl.u32 %v843, 7
        %v845 = vsub.s32 5, %v844
        %v846 = vrot.slane %v317, %v845
        %v847 = vlaneseq
        %v848 = vshrl.u32 %v847, 7
        %v849 = vsub.s32 6, %v848
        %v850 = vrot.slane %v317, %v849
        %v851 = vlaneseq
        %v852 = vshrl.u32 %v851, 7
        %v853 = vsub.s32 7, %v852
        %v854 = vrot.slane %v317, %v853
        %vm863 = vcmask 523264
        %v865 = vsel %vm863, %v340, 0
        %867 = vmatprep.subr.bf16.mxu0 %v687
        %868 = vmatpush1.bf16.msra.mxu0 %v686
        %869 = vmatprep.subr.bf16.mxu0 %v679
        %870 = vmatpush1.bf16.msra.mxu0 %v678
        %871 = vmatprep.subr.bf16.mxu0 %v671
        %872 = vmatpush1.bf16.msra.mxu0 %v670
        %873 = vmatprep.subr.bf16.mxu0 %v663
        %874 = vmatpush1.bf16.msra.mxu0 %v662
        %875 = vmatprep.subr.bf16.mxu0 %v655
        %876 = vmatpush1.bf16.msra.mxu0 %v654
        %877 = vmatprep.subr.bf16.mxu0 %v647
        %878 = vmatpush1.bf16.msra.mxu0 %v646
        %879 = vmatprep.subr.bf16.mxu0 %v639
        %880 = vmatpush1.bf16.msra.mxu0 %v638
        %881 = vmatprep.subr.bf16.mxu0 %v631
        %882 = vmatpush1.bf16.msra.mxu0 %v630
        %883 = vmatprep.subr.bf16.mxu0 0
        %884 = vmatpush2.bf16.msra.mxu0 0
        %885 = vmatprep.subr.bf16.mxu0 0
        %886 = vmatpush2.bf16.msra.mxu0 0
        %887 = vmatprep.subr.bf16.mxu0 0
        %888 = vmatpush2.bf16.msra.mxu0 0
        %889 = vmatprep.subr.bf16.mxu0 0
        %890 = vmatpush2.bf16.msra.mxu0 0
        %891 = vmatprep.subr.bf16.mxu0 %v719
        %892 = vmatpush2.bf16.msra.mxu0 %v718
        %893 = vmatprep.subr.bf16.mxu0 %v711
        %894 = vmatpush2.bf16.msra.mxu0 %v710
        %895 = vmatprep.subr.bf16.mxu0 %v703
        %896 = vmatpush2.bf16.msra.mxu0 %v702
        %897 = vmatprep.subr.bf16.mxu0 %v695
        %898 = vmatpush2.bf16.msra.mxu0 %v694
        %899 = vmatprep.mubr.bf16.mxu0 %v865
        %900 = vmatmul.mubr.bf16.gmra.mxu0 %v333
        %v901 = vpop.f32.mrf.mxu0
        %v902 = vadd.f32 %v826, %v901
        %v903 = vpop.f32.mrf.mxu0
        %v904 = vadd.f32 %v830, %v903
        %v905 = vpop.f32.mrf.mxu0
        %v906 = vpop.f32.mrf.mxu0
        %907 = vdwg.mxu0
        %908 = vmatprep.subr.bf16.mxu0 %v689
        %909 = vmatpush1.bf16.msra.mxu0 %v688
        %910 = vmatprep.subr.bf16.mxu0 %v681
        %911 = vmatpush1.bf16.msra.mxu0 %v680
        %912 = vmatprep.subr.bf16.mxu0 %v673
        %913 = vmatpush1.bf16.msra.mxu0 %v672
        %914 = vmatprep.subr.bf16.mxu0 %v665
        %915 = vmatpush1.bf16.msra.mxu0 %v664
        %916 = vmatprep.subr.bf16.mxu0 %v657
        %917 = vmatpush1.bf16.msra.mxu0 %v656
        %918 = vmatprep.subr.bf16.mxu0 %v649
        %919 = vmatpush1.bf16.msra.mxu0 %v648
        %920 = vmatprep.subr.bf16.mxu0 %v641
        %921 = vmatpush1.bf16.msra.mxu0 %v640
        %922 = vmatprep.subr.bf16.mxu0 %v633
        %923 = vmatpush1.bf16.msra.mxu0 %v632
        %924 = vmatprep.subr.bf16.mxu0 0
        %925 = vmatpush2.bf16.msra.mxu0 0
        %926 = vmatprep.subr.bf16.mxu0 0
        %927 = vmatpush2.bf16.msra.mxu0 0
        %928 = vmatprep.subr.bf16.mxu0 0
        %929 = vmatpush2.bf16.msra.mxu0 0
        %930 = vmatprep.subr.bf16.mxu0 0
        %931 = vmatpush2.bf16.msra.mxu0 0
        %932 = vmatprep.subr.bf16.mxu0 %v721
        %933 = vmatpush2.bf16.msra.mxu0 %v720
        %934 = vmatprep.subr.bf16.mxu0 %v713
        %935 = vmatpush2.bf16.msra.mxu0 %v712
        %936 = vmatprep.subr.bf16.mxu0 %v705
        %937 = vmatpush2.bf16.msra.mxu0 %v704
        %938 = vmatprep.subr.bf16.mxu0 %v697
        %939 = vmatpush2.bf16.msra.mxu0 %v696
        %940 = vmatprep.mubr.bf16.mxu0 %v865
        %941 = vmatmul.mubr.bf16.gmra.mxu0 %v333
        %v942 = vpop.f32.mrf.mxu0
        %v943 = vadd.f32 %v834, %v942
        %v944 = vpop.f32.mrf.mxu0
        %v945 = vadd.f32 %v838, %v944
        %v946 = vpop.f32.mrf.mxu0
        %v947 = vpop.f32.mrf.mxu0
        %948 = vdwg.mxu0
        %949 = vmatprep.subr.bf16.mxu0 %v691
        %950 = vmatpush1.bf16.msra.mxu0 %v690
        %951 = vmatprep.subr.bf16.mxu0 %v683
        %952 = vmatpush1.bf16.msra.mxu0 %v682
        %953 = vmatprep.subr.bf16.mxu0 %v675
        %954 = vmatpush1.bf16.msra.mxu0 %v674
        %955 = vmatprep.subr.bf16.mxu0 %v667
        %956 = vmatpush1.bf16.msra.mxu0 %v666
        %957 = vmatprep.subr.bf16.mxu0 %v659
        %958 = vmatpush1.bf16.msra.mxu0 %v658
        %959 = vmatprep.subr.bf16.mxu0 %v651
        %960 = vmatpush1.bf16.msra.mxu0 %v650
        %961 = vmatprep.subr.bf16.mxu0 %v643
        %962 = vmatpush1.bf16.msra.mxu0 %v642
        %963 = vmatprep.subr.bf16.mxu0 %v635
        %964 = vmatpush1.bf16.msra.mxu0 %v634
        %965 = vmatprep.subr.bf16.mxu0 0
        %966 = vmatpush2.bf16.msra.mxu0 0
        %967 = vmatprep.subr.bf16.mxu0 0
        %968 = vmatpush2.bf16.msra.mxu0 0
        %969 = vmatprep.subr.bf16.mxu0 0
        %970 = vmatpush2.bf16.msra.mxu0 0
        %971 = vmatprep.subr.bf16.mxu0 0
        %972 = vmatpush2.bf16.msra.mxu0 0
        %973 = vmatprep.subr.bf16.mxu0 %v723
        %974 = vmatpush2.bf16.msra.mxu0 %v722
        %975 = vmatprep.subr.bf16.mxu0 %v715
        %976 = vmatpush2.bf16.msra.mxu0 %v714
        %977 = vmatprep.subr.bf16.mxu0 %v707
        %978 = vmatpush2.bf16.msra.mxu0 %v706
        %979 = vmatprep.subr.bf16.mxu0 %v699
        %980 = vmatpush2.bf16.msra.mxu0 %v698
        %981 = vmatprep.mubr.bf16.mxu0 %v865
        %982 = vmatmul.mubr.bf16.gmra.mxu0 %v333
        %v983 = vpop.f32.mrf.mxu0
        %v984 = vadd.f32 %v842, %v983
        %v985 = vpop.f32.mrf.mxu0
        %v986 = vadd.f32 %v846, %v985
        %v987 = vpop.f32.mrf.mxu0
        %v988 = vpop.f32.mrf.mxu0
        %989 = vdwg.mxu0
        %990 = vmatprep.subr.bf16.mxu0 %v693
        %991 = vmatpush1.bf16.msra.mxu0 %v692
        %992 = vmatprep.subr.bf16.mxu0 %v685
        %993 = vmatpush1.bf16.msra.mxu0 %v684
        %994 = vmatprep.subr.bf16.mxu0 %v677
        %995 = vmatpush1.bf16.msra.mxu0 %v676
        %996 = vmatprep.subr.bf16.mxu0 %v669
        %997 = vmatpush1.bf16.msra.mxu0 %v668
        %998 = vmatprep.subr.bf16.mxu0 %v661
        %999 = vmatpush1.bf16.msra.mxu0 %v660
        %1000 = vmatprep.subr.bf16.mxu0 %v653
        %1001 = vmatpush1.bf16.msra.mxu0 %v652
        %1002 = vmatprep.subr.bf16.mxu0 %v645
        %1003 = vmatpush1.bf16.msra.mxu0 %v644
        %1004 = vmatprep.subr.bf16.mxu0 %v637
        %1005 = vmatpush1.bf16.msra.mxu0 %v636
        %1006 = vmatprep.subr.bf16.mxu0 0
        %1007 = vmatpush2.bf16.msra.mxu0 0
        %1008 = vmatprep.subr.bf16.mxu0 0
        %1009 = vmatpush2.bf16.msra.mxu0 0
        %1010 = vmatprep.subr.bf16.mxu0 0
        %1011 = vmatpush2.bf16.msra.mxu0 0
        %1012 = vmatprep.subr.bf16.mxu0 0
        %1013 = vmatpush2.bf16.msra.mxu0 0
        %1014 = vmatprep.subr.bf16.mxu0 %v725
        %1015 = vmatpush2.bf16.msra.mxu0 %v724
        %1016 = vmatprep.subr.bf16.mxu0 %v717
        %1017 = vmatpush2.bf16.msra.mxu0 %v716
        %1018 = vmatprep.subr.bf16.mxu0 %v709
        %1019 = vmatpush2.bf16.msra.mxu0 %v708
        %1020 = vmatprep.subr.bf16.mxu0 %v701
        %1021 = vmatpush2.bf16.msra.mxu0 %v700
        %1022 = vmatprep.mubr.bf16.mxu0 %v865
        %1023 = vmatmul.mubr.bf16.gmra.mxu0 %v333
        %v1024 = vpop.f32.mrf.mxu0
        %v1025 = vadd.f32 %v850, %v1024
        %v1026 = vpop.f32.mrf.mxu0
        %v1027 = vadd.f32 %v854, %v1026
        %v1028 = vpop.f32.mrf.mxu0
        %v1029 = vpop.f32.mrf.mxu0
        %1030 = vdwg.mxu0
        %v1031 = vmax.f32 %v902, 0.0
        %v1032 = vmax.f32 %v904, 0.0
        %v1033 = vmax.f32 %v943, 0.0
        %v1034 = vmax.f32 %v945, 0.0
        %v1035 = vmax.f32 %v984, 0.0
        %v1036 = vmax.f32 %v986, 0.0
        %v1037 = vmax.f32 %v1025, 0.0
        %v1038 = vmax.f32 %v1027, 0.0
        %v1039 = vadd.f32 %v1031, 0.0
        %v1040 = vadd.f32 %v1032, 0.0
        %v1041 = vadd.f32 %v1033, 0.0
        %v1042 = vadd.f32 %v1034, 0.0
        %v1043 = vadd.f32 %v1035, 0.0
        %v1044 = vadd.f32 %v1036, 0.0
        %v1045 = vadd.f32 %v1037, 0.0
        %v1046 = vadd.f32 %v1038, 0.0
        %v1047 = vld [vmem:[%s3] sm:$0xff]
        %v1048 = vld [vmem:[%s3 + $0x8] sm:$0xff]
        %v1049 = vld [vmem:[%s3 + $0x10] sm:$0xff]
        %v1050 = vld [vmem:[%s3 + $0x18] sm:$0xff]
        %v1051 = vld [vmem:[%s3 + $0x20] sm:$0xff]
        %v1052 = vld [vmem:[%s3 + $0x28] sm:$0xff]
        %v1053 = vld [vmem:[%s3 + $0x30] sm:$0xff]
        %v1054 = vld [vmem:[%s3 + $0x38] sm:$0xff]
        %v1055 = vld [vmem:[%s3 + $0x40] sm:$0xff]
        %v1056 = vld [vmem:[%s3 + $0x48] sm:$0xff]
        %v1057 = vld [vmem:[%s3 + $0x50] sm:$0xff]
        %v1058 = vld [vmem:[%s3 + $0x58] sm:$0xff]
        %v1059 = vld [vmem:[%s3 + $0x60] sm:$0xff]
        %v1060 = vld [vmem:[%s3 + $0x68] sm:$0xff]
        %v1061 = vld [vmem:[%s3 + $0x70] sm:$0xff]
        %v1062 = vld [vmem:[%s3 + $0x78] sm:$0xff]
        %v1063 = vld [vmem:[%s3 + $0x80] sm:$0xff]
        %v1064 = vld [vmem:[%s3 + $0x88] sm:$0xff]
        %v1065 = vld [vmem:[%s3 + $0x90] sm:$0xff]
        %v1066 = vld [vmem:[%s3 + $0x98] sm:$0xff]
        %v1067 = vld [vmem:[%s3 + $0xa0] sm:$0xff]
        %v1068 = vld [vmem:[%s3 + $0xa8] sm:$0xff]
        %v1069 = vld [vmem:[%s3 + $0xb0] sm:$0xff]
        %v1070 = vld [vmem:[%s3 + $0xb8] sm:$0xff]
        %v1071 = vld [vmem:[%s3 + $0xc0] sm:$0xff]
        %v1072 = vld [vmem:[%s3 + $0xc8] sm:$0xff]
        %v1073 = vld [vmem:[%s3 + $0xd0] sm:$0xff]
        %v1074 = vld [vmem:[%s3 + $0xd8] sm:$0xff]
        %v1075 = vld [vmem:[%s3 + $0xe0] sm:$0xff]
        %v1076 = vld [vmem:[%s3 + $0xe8] sm:$0xff]
        %v1077 = vld [vmem:[%s3 + $0xf0] sm:$0xff]
        %v1078 = vld [vmem:[%s3 + $0xf8] sm:$0xff]
        %v1079 = vld [vmem:[%s3 + $0x100] sm:$0xff]
        %v1080 = vld [vmem:[%s3 + $0x108] sm:$0xff]
        %v1081 = vld [vmem:[%s3 + $0x110] sm:$0xff]
        %v1082 = vld [vmem:[%s3 + $0x118] sm:$0xff]
        %v1083 = vld [vmem:[%s3 + $0x120] sm:$0xff]
        %v1084 = vld [vmem:[%s3 + $0x128] sm:$0xff]
        %v1085 = vld [vmem:[%s3 + $0x130] sm:$0xff]
        %v1086 = vld [vmem:[%s3 + $0x138] sm:$0xff]
        %v1087 = vld [vmem:[%s3 + $0x140] sm:$0xff]
        %v1088 = vld [vmem:[%s3 + $0x148] sm:$0xff]
        %v1089 = vld [vmem:[%s3 + $0x150] sm:$0xff]
        %v1090 = vld [vmem:[%s3 + $0x158] sm:$0xff]
        %v1091 = vld [vmem:[%s3 + $0x160] sm:$0xff]
        %v1092 = vld [vmem:[%s3 + $0x168] sm:$0xff]
        %v1093 = vld [vmem:[%s3 + $0x170] sm:$0xff]
        %v1094 = vld [vmem:[%s3 + $0x178] sm:$0xff]
        %v1095 = vld [vmem:[%s3 + $0x180] sm:$0xff]
        %v1096 = vld [vmem:[%s3 + $0x188] sm:$0xff]
        %v1097 = vld [vmem:[%s3 + $0x190] sm:$0xff]
        %v1098 = vld [vmem:[%s3 + $0x198] sm:$0xff]
        %v1099 = vld [vmem:[%s3 + $0x1a0] sm:$0xff]
        %v1100 = vld [vmem:[%s3 + $0x1a8] sm:$0xff]
        %v1101 = vld [vmem:[%s3 + $0x1b0] sm:$0xff]
        %v1102 = vld [vmem:[%s3 + $0x1b8] sm:$0xff]
        %v1103 = vld [vmem:[%s3 + $0x1c0] sm:$0xff]
        %v1104 = vld [vmem:[%s3 + $0x1c8] sm:$0xff]
        %v1105 = vld [vmem:[%s3 + $0x1d0] sm:$0xff]
        %v1106 = vld [vmem:[%s3 + $0x1d8] sm:$0xff]
        %v1107 = vld [vmem:[%s3 + $0x1e0] sm:$0xff]
        %v1108 = vld [vmem:[%s3 + $0x1e8] sm:$0xff]
        %v1109 = vld [vmem:[%s3 + $0x1f0] sm:$0xff]
        %v1110 = vld [vmem:[%s3 + $0x1f8] sm:$0xff]
        %v1111 = vld [vmem:[%s3 + $0x200] sm:$0xff]
        %v1112 = vld [vmem:[%s3 + $0x208] sm:$0xff]
        %v1113 = vld [vmem:[%s3 + $0x210] sm:$0xff]
        %v1114 = vld [vmem:[%s3 + $0x218] sm:$0xff]
        %v1115 = vld [vmem:[%s3 + $0x220] sm:$0xff]
        %v1116 = vld [vmem:[%s3 + $0x228] sm:$0xff]
        %v1117 = vld [vmem:[%s3 + $0x230] sm:$0xff]
        %v1118 = vld [vmem:[%s3 + $0x238] sm:$0xff]
        %v1119 = vld [vmem:[%s3 + $0x240] sm:$0xff]
        %v1120 = vld [vmem:[%s3 + $0x248] sm:$0xff]
        %v1121 = vld [vmem:[%s3 + $0x250] sm:$0xff]
        %v1122 = vld [vmem:[%s3 + $0x258] sm:$0xff]
        %v1123 = vld [vmem:[%s3 + $0x260] sm:$0xff]
        %v1124 = vld [vmem:[%s3 + $0x268] sm:$0xff]
        %v1125 = vld [vmem:[%s3 + $0x270] sm:$0xff]
        %v1126 = vld [vmem:[%s3 + $0x278] sm:$0xff]
        %v1127 = vld [vmem:[%s3 + $0x280] sm:$0xff]
        %v1128 = vld [vmem:[%s3 + $0x288] sm:$0xff]
        %v1129 = vld [vmem:[%s3 + $0x290] sm:$0xff]
        %v1130 = vld [vmem:[%s3 + $0x298] sm:$0xff]
        %v1131 = vld [vmem:[%s3 + $0x2a0] sm:$0xff]
        %v1132 = vld [vmem:[%s3 + $0x2a8] sm:$0xff]
        %v1133 = vld [vmem:[%s3 + $0x2b0] sm:$0xff]
        %v1134 = vld [vmem:[%s3 + $0x2b8] sm:$0xff]
        %v1135 = vld [vmem:[%s3 + $0x2c0] sm:$0xff]
        %v1136 = vld [vmem:[%s3 + $0x2c8] sm:$0xff]
        %v1137 = vld [vmem:[%s3 + $0x2d0] sm:$0xff]
        %v1138 = vld [vmem:[%s3 + $0x2d8] sm:$0xff]
        %v1139 = vld [vmem:[%s3 + $0x2e0] sm:$0xff]
        %v1140 = vld [vmem:[%s3 + $0x2e8] sm:$0xff]
        %v1141 = vld [vmem:[%s3 + $0x2f0] sm:$0xff]
        %v1142 = vld [vmem:[%s3 + $0x2f8] sm:$0xff]
        %v1143 = vld [vmem:[%s3 + $0x300] sm:$0xff]
        %v1144 = vld [vmem:[%s3 + $0x308] sm:$0xff]
        %v1145 = vld [vmem:[%s3 + $0x310] sm:$0xff]
        %v1146 = vld [vmem:[%s3 + $0x318] sm:$0xff]
        %v1147 = vld [vmem:[%s3 + $0x320] sm:$0xff]
        %v1148 = vld [vmem:[%s3 + $0x328] sm:$0xff]
        %v1149 = vld [vmem:[%s3 + $0x330] sm:$0xff]
        %v1150 = vld [vmem:[%s3 + $0x338] sm:$0xff]
        %v1151 = vld [vmem:[%s3 + $0x340] sm:$0xff]
        %v1152 = vld [vmem:[%s3 + $0x348] sm:$0xff]
        %v1153 = vld [vmem:[%s3 + $0x350] sm:$0xff]
        %v1154 = vld [vmem:[%s3 + $0x358] sm:$0xff]
        %v1155 = vld [vmem:[%s3 + $0x360] sm:$0xff]
        %v1156 = vld [vmem:[%s3 + $0x368] sm:$0xff]
        %v1157 = vld [vmem:[%s3 + $0x370] sm:$0xff]
        %v1158 = vld [vmem:[%s3 + $0x378] sm:$0xff]
        %v1159 = vld [vmem:[%s3 + $0x380] sm:$0xff]
        %v1160 = vld [vmem:[%s3 + $0x388] sm:$0xff]
        %v1161 = vld [vmem:[%s3 + $0x390] sm:$0xff]
        %v1162 = vld [vmem:[%s3 + $0x398] sm:$0xff]
        %v1163 = vld [vmem:[%s3 + $0x3a0] sm:$0xff]
        %v1164 = vld [vmem:[%s3 + $0x3a8] sm:$0xff]
        %v1165 = vld [vmem:[%s3 + $0x3b0] sm:$0xff]
        %v1166 = vld [vmem:[%s3 + $0x3b8] sm:$0xff]
        %v1167 = vld [vmem:[%s3 + $0x3c0] sm:$0xff]
        %v1168 = vld [vmem:[%s3 + $0x3c8] sm:$0xff]
        %v1169 = vld [vmem:[%s3 + $0x3d0] sm:$0xff]
        %v1170 = vld [vmem:[%s3 + $0x3d8] sm:$0xff]
        %v1171 = vld [vmem:[%s3 + $0x3e0] sm:$0xff]
        %v1172 = vld [vmem:[%s3 + $0x3e8] sm:$0xff]
        %v1173 = vld [vmem:[%s3 + $0x3f0] sm:$0xff]
        %v1174 = vld [vmem:[%s3 + $0x3f8] sm:$0xff]
        %v1175 = vld [vmem:[%s4] sm:$0x1]
        %1176 = vmatprep.subr.mxu0 0.0
        %1177 = vmatpush1.msra.mxu0 %v1062
        %1178 = vmatprep.subr.mxu0 0.0
        %1179 = vmatpush1.msra.mxu0 %v1061
        %1180 = vmatprep.subr.mxu0 0.0
        %1181 = vmatpush1.msra.mxu0 %v1060
        %1182 = vmatprep.subr.mxu0 0.0
        %1183 = vmatpush1.msra.mxu0 %v1059
        %1184 = vmatprep.subr.mxu0 0.0
        %1185 = vmatpush1.msra.mxu0 %v1058
        %1186 = vmatprep.subr.mxu0 0.0
        %1187 = vmatpush1.msra.mxu0 %v1057
        %1188 = vmatprep.subr.mxu0 0.0
        %1189 = vmatpush1.msra.mxu0 %v1056
        %1190 = vmatprep.subr.mxu0 0.0
        %1191 = vmatpush1.msra.mxu0 %v1055
        %1192 = vmatprep.subr.mxu0 0.0
        %1193 = vmatpush1.msra.mxu0 %v1054
        %1194 = vmatprep.subr.mxu0 0.0
        %1195 = vmatpush1.msra.mxu0 %v1053
        %1196 = vmatprep.subr.mxu0 0.0
        %1197 = vmatpush1.msra.mxu0 %v1052
        %1198 = vmatprep.subr.mxu0 0.0
        %1199 = vmatpush1.msra.mxu0 %v1051
        %1200 = vmatprep.subr.mxu0 0.0
        %1201 = vmatpush1.msra.mxu0 %v1050
        %1202 = vmatprep.subr.mxu0 0.0
        %1203 = vmatpush1.msra.mxu0 %v1049
        %1204 = vmatprep.subr.mxu0 0.0
        %1205 = vmatpush1.msra.mxu0 %v1048
        %1206 = vmatprep.subr.mxu0 0.0
        %1207 = vmatpush1.msra.mxu0 %v1047
        %1208 = vmatprep.subr.mxu0 0.0
        %1209 = vmatpush2.msra.mxu0 %v1078
        %1210 = vmatprep.subr.mxu0 0.0
        %1211 = vmatpush2.msra.mxu0 %v1077
        %1212 = vmatprep.subr.mxu0 0.0
        %1213 = vmatpush2.msra.mxu0 %v1076
        %1214 = vmatprep.subr.mxu0 0.0
        %1215 = vmatpush2.msra.mxu0 %v1075
        %1216 = vmatprep.subr.mxu0 0.0
        %1217 = vmatpush2.msra.mxu0 %v1074
        %1218 = vmatprep.subr.mxu0 0.0
        %1219 = vmatpush2.msra.mxu0 %v1073
        %1220 = vmatprep.subr.mxu0 0.0
        %1221 = vmatpush2.msra.mxu0 %v1072
        %1222 = vmatprep.subr.mxu0 0.0
        %1223 = vmatpush2.msra.mxu0 %v1071
        %1224 = vmatprep.subr.mxu0 0.0
        %1225 = vmatpush2.msra.mxu0 %v1070
        %1226 = vmatprep.subr.mxu0 0.0
        %1227 = vmatpush2.msra.mxu0 %v1069
        %1228 = vmatprep.subr.mxu0 0.0
        %1229 = vmatpush2.msra.mxu0 %v1068
        %1230 = vmatprep.subr.mxu0 0.0
        %1231 = vmatpush2.msra.mxu0 %v1067
        %1232 = vmatprep.subr.mxu0 0.0
        %1233 = vmatpush2.msra.mxu0 %v1066
        %1234 = vmatprep.subr.mxu0 0.0
        %1235 = vmatpush2.msra.mxu0 %v1065
        %1236 = vmatprep.subr.mxu0 0.0
        %1237 = vmatpush2.msra.mxu0 %v1064
        %1238 = vmatprep.subr.mxu0 0.0
        %1239 = vmatpush2.msra.mxu0 %v1063
        %1240 = vmatprep.mubr.f32.mxu0 %v1040
        %1241 = vmatmul.mubr.f32.gmra.mxu0 %v1039
        %v1242 = vpop.f32.mrf.mxu0
        %v1243 = vadd.f32 %v1175, %v1242
        %v1244 = vpop.f32.mrf.mxu0
        %1245 = vdwg.mxu0
        %1246 = vmatprep.subr.mxu0 0.0
        %1247 = vmatpush1.msra.mxu0 %v1094
        %1248 = vmatprep.subr.mxu0 0.0
        %1249 = vmatpush1.msra.mxu0 %v1093
        %1250 = vmatprep.subr.mxu0 0.0
        %1251 = vmatpush1.msra.mxu0 %v1092
        %1252 = vmatprep.subr.mxu0 0.0
        %1253 = vmatpush1.msra.mxu0 %v1091
        %1254 = vmatprep.subr.mxu0 0.0
        %1255 = vmatpush1.msra.mxu0 %v1090
        %1256 = vmatprep.subr.mxu0 0.0
        %1257 = vmatpush1.msra.mxu0 %v1089
        %1258 = vmatprep.subr.mxu0 0.0
        %1259 = vmatpush1.msra.mxu0 %v1088
        %1260 = vmatprep.subr.mxu0 0.0
        %1261 = vmatpush1.msra.mxu0 %v1087
        %1262 = vmatprep.subr.mxu0 0.0
        %1263 = vmatpush1.msra.mxu0 %v1086
        %1264 = vmatprep.subr.mxu0 0.0
        %1265 = vmatpush1.msra.mxu0 %v1085
        %1266 = vmatprep.subr.mxu0 0.0
        %1267 = vmatpush1.msra.mxu0 %v1084
        %1268 = vmatprep.subr.mxu0 0.0
        %1269 = vmatpush1.msra.mxu0 %v1083
        %1270 = vmatprep.subr.mxu0 0.0
        %1271 = vmatpush1.msra.mxu0 %v1082
        %1272 = vmatprep.subr.mxu0 0.0
        %1273 = vmatpush1.msra.mxu0 %v1081
        %1274 = vmatprep.subr.mxu0 0.0
        %1275 = vmatpush1.msra.mxu0 %v1080
        %1276 = vmatprep.subr.mxu0 0.0
        %1277 = vmatpush1.msra.mxu0 %v1079
        %1278 = vmatprep.subr.mxu0 0.0
        %1279 = vmatpush2.msra.mxu0 %v1110
        %1280 = vmatprep.subr.mxu0 0.0
        %1281 = vmatpush2.msra.mxu0 %v1109
        %1282 = vmatprep.subr.mxu0 0.0
        %1283 = vmatpush2.msra.mxu0 %v1108
        %1284 = vmatprep.subr.mxu0 0.0
        %1285 = vmatpush2.msra.mxu0 %v1107
        %1286 = vmatprep.subr.mxu0 0.0
        %1287 = vmatpush2.msra.mxu0 %v1106
        %1288 = vmatprep.subr.mxu0 0.0
        %1289 = vmatpush2.msra.mxu0 %v1105
        %1290 = vmatprep.subr.mxu0 0.0
        %1291 = vmatpush2.msra.mxu0 %v1104
        %1292 = vmatprep.subr.mxu0 0.0
        %1293 = vmatpush2.msra.mxu0 %v1103
        %1294 = vmatprep.subr.mxu0 0.0
        %1295 = vmatpush2.msra.mxu0 %v1102
        %1296 = vmatprep.subr.mxu0 0.0
        %1297 = vmatpush2.msra.mxu0 %v1101
        %1298 = vmatprep.subr.mxu0 0.0
        %1299 = vmatpush2.msra.mxu0 %v1100
        %1300 = vmatprep.subr.mxu0 0.0
        %1301 = vmatpush2.msra.mxu0 %v1099
        %1302 = vmatprep.subr.mxu0 0.0
        %1303 = vmatpush2.msra.mxu0 %v1098
        %1304 = vmatprep.subr.mxu0 0.0
        %1305 = vmatpush2.msra.mxu0 %v1097
        %1306 = vmatprep.subr.mxu0 0.0
        %1307 = vmatpush2.msra.mxu0 %v1096
        %1308 = vmatprep.subr.mxu0 0.0
        %1309 = vmatpush2.msra.mxu0 %v1095
        %1310 = vmatprep.mubr.f32.mxu0 %v1042
        %1311 = vmatmul.mubr.f32.gmra.mxu0 %v1041
        %v1312 = vpop.f32.mrf.mxu0
        %v1313 = vadd.f32 %v1243, %v1312
        %v1314 = vpop.f32.mrf.mxu0
        %1315 = vdwg.mxu0
        %1316 = vmatprep.subr.mxu0 0.0
        %1317 = vmatpush1.msra.mxu0 %v1126
        %1318 = vmatprep.subr.mxu0 0.0
        %1319 = vmatpush1.msra.mxu0 %v1125
        %1320 = vmatprep.subr.mxu0 0.0
        %1321 = vmatpush1.msra.mxu0 %v1124
        %1322 = vmatprep.subr.mxu0 0.0
        %1323 = vmatpush1.msra.mxu0 %v1123
        %1324 = vmatprep.subr.mxu0 0.0
        %1325 = vmatpush1.msra.mxu0 %v1122
        %1326 = vmatprep.subr.mxu0 0.0
        %1327 = vmatpush1.msra.mxu0 %v1121
        %1328 = vmatprep.subr.mxu0 0.0
        %1329 = vmatpush1.msra.mxu0 %v1120
        %1330 = vmatprep.subr.mxu0 0.0
        %1331 = vmatpush1.msra.mxu0 %v1119
        %1332 = vmatprep.subr.mxu0 0.0
        %1333 = vmatpush1.msra.mxu0 %v1118
        %1334 = vmatprep.subr.mxu0 0.0
        %1335 = vmatpush1.msra.mxu0 %v1117
        %1336 = vmatprep.subr.mxu0 0.0
        %1337 = vmatpush1.msra.mxu0 %v1116
        %1338 = vmatprep.subr.mxu0 0.0
        %1339 = vmatpush1.msra.mxu0 %v1115
        %1340 = vmatprep.subr.mxu0 0.0
        %1341 = vmatpush1.msra.mxu0 %v1114
        %1342 = vmatprep.subr.mxu0 0.0
        %1343 = vmatpush1.msra.mxu0 %v1113
        %1344 = vmatprep.subr.mxu0 0.0
        %1345 = vmatpush1.msra.mxu0 %v1112
        %1346 = vmatprep.subr.mxu0 0.0
        %1347 = vmatpush1.msra.mxu0 %v1111
        %1348 = vmatprep.subr.mxu0 0.0
        %1349 = vmatpush2.msra.mxu0 %v1142
        %1350 = vmatprep.subr.mxu0 0.0
        %1351 = vmatpush2.msra.mxu0 %v1141
        %1352 = vmatprep.subr.mxu0 0.0
        %1353 = vmatpush2.msra.mxu0 %v1140
        %1354 = vmatprep.subr.mxu0 0.0
        %1355 = vmatpush2.msra.mxu0 %v1139
        %1356 = vmatprep.subr.mxu0 0.0
        %1357 = vmatpush2.msra.mxu0 %v1138
        %1358 = vmatprep.subr.mxu0 0.0
        %1359 = vmatpush2.msra.mxu0 %v1137
        %1360 = vmatprep.subr.mxu0 0.0
        %1361 = vmatpush2.msra.mxu0 %v1136
        %1362 = vmatprep.subr.mxu0 0.0
        %1363 = vmatpush2.msra.mxu0 %v1135
        %1364 = vmatprep.subr.mxu0 0.0
        %1365 = vmatpush2.msra.mxu0 %v1134
        %1366 = vmatprep.subr.mxu0 0.0
        %1367 = vmatpush2.msra.mxu0 %v1133
        %1368 = vmatprep.subr.mxu0 0.0
        %1369 = vmatpush2.msra.mxu0 %v1132
        %1370 = vmatprep.subr.mxu0 0.0
        %1371 = vmatpush2.msra.mxu0 %v1131
        %1372 = vmatprep.subr.mxu0 0.0
        %1373 = vmatpush2.msra.mxu0 %v1130
        %1374 = vmatprep.subr.mxu0 0.0
        %1375 = vmatpush2.msra.mxu0 %v1129
        %1376 = vmatprep.subr.mxu0 0.0
        %1377 = vmatpush2.msra.mxu0 %v1128
        %1378 = vmatprep.subr.mxu0 0.0
        %1379 = vmatpush2.msra.mxu0 %v1127
        %1380 = vmatprep.mubr.f32.mxu0 %v1044
        %1381 = vmatmul.mubr.f32.gmra.mxu0 %v1043
        %v1382 = vpop.f32.mrf.mxu0
        %v1383 = vadd.f32 %v1313, %v1382
        %v1384 = vpop.f32.mrf.mxu0
        %1385 = vdwg.mxu0
        %1386 = vmatprep.subr.mxu0 0.0
        %1387 = vmatpush1.msra.mxu0 %v1158
        %1388 = vmatprep.subr.mxu0 0.0
        %1389 = vmatpush1.msra.mxu0 %v1157
        %1390 = vmatprep.subr.mxu0 0.0
        %1391 = vmatpush1.msra.mxu0 %v1156
        %1392 = vmatprep.subr.mxu0 0.0
        %1393 = vmatpush1.msra.mxu0 %v1155
        %1394 = vmatprep.subr.mxu0 0.0
        %1395 = vmatpush1.msra.mxu0 %v1154
        %1396 = vmatprep.subr.mxu0 0.0
        %1397 = vmatpush1.msra.mxu0 %v1153
        %1398 = vmatprep.subr.mxu0 0.0
        %1399 = vmatpush1.msra.mxu0 %v1152
        %1400 = vmatprep.subr.mxu0 0.0
        %1401 = vmatpush1.msra.mxu0 %v1151
        %1402 = vmatprep.subr.mxu0 0.0
        %1403 = vmatpush1.msra.mxu0 %v1150
        %1404 = vmatprep.subr.mxu0 0.0
        %1405 = vmatpush1.msra.mxu0 %v1149
        %1406 = vmatprep.subr.mxu0 0.0
        %1407 = vmatpush1.msra.mxu0 %v1148
        %1408 = vmatprep.subr.mxu0 0.0
        %1409 = vmatpush1.msra.mxu0 %v1147
        %1410 = vmatprep.subr.mxu0 0.0
        %1411 = vmatpush1.msra.mxu0 %v1146
        %1412 = vmatprep.subr.mxu0 0.0
        %1413 = vmatpush1.msra.mxu0 %v1145
        %1414 = vmatprep.subr.mxu0 0.0
        %1415 = vmatpush1.msra.mxu0 %v1144
        %1416 = vmatprep.subr.mxu0 0.0
        %1417 = vmatpush1.msra.mxu0 %v1143
        %1418 = vmatprep.subr.mxu0 0.0
        %1419 = vmatpush2.msra.mxu0 %v1174
        %1420 = vmatprep.subr.mxu0 0.0
        %1421 = vmatpush2.msra.mxu0 %v1173
        %1422 = vmatprep.subr.mxu0 0.0
        %1423 = vmatpush2.msra.mxu0 %v1172
        %1424 = vmatprep.subr.mxu0 0.0
        %1425 = vmatpush2.msra.mxu0 %v1171
        %1426 = vmatprep.subr.mxu0 0.0
        %1427 = vmatpush2.msra.mxu0 %v1170
        %1428 = vmatprep.subr.mxu0 0.0
        %1429 = vmatpush2.msra.mxu0 %v1169
        %1430 = vmatprep.subr.mxu0 0.0
        %1431 = vmatpush2.msra.mxu0 %v1168
        %1432 = vmatprep.subr.mxu0 0.0
        %1433 = vmatpush2.msra.mxu0 %v1167
        %1434 = vmatprep.subr.mxu0 0.0
        %1435 = vmatpush2.msra.mxu0 %v1166
        %1436 = vmatprep.subr.mxu0 0.0
        %1437 = vmatpush2.msra.mxu0 %v1165
        %1438 = vmatprep.subr.mxu0 0.0
        %1439 = vmatpush2.msra.mxu0 %v1164
        %1440 = vmatprep.subr.mxu0 0.0
        %1441 = vmatpush2.msra.mxu0 %v1163
        %1442 = vmatprep.subr.mxu0 0.0
        %1443 = vmatpush2.msra.mxu0 %v1162
        %1444 = vmatprep.subr.mxu0 0.0
        %1445 = vmatpush2.msra.mxu0 %v1161
        %1446 = vmatprep.subr.mxu0 0.0
        %1447 = vmatpush2.msra.mxu0 %v1160
        %1448 = vmatprep.subr.mxu0 0.0
        %1449 = vmatpush2.msra.mxu0 %v1159
        %1450 = vmatprep.mubr.f32.mxu0 %v1046
        %1451 = vmatmul.mubr.f32.gmra.mxu0 %v1045
        %v1452 = vpop.f32.mrf.mxu0
        %v1453 = vadd.f32 %v1383, %v1452
        %v1454 = vpop.f32.mrf.mxu0
        %1455 = vdwg.mxu0
        %1456 = vst [vmem:[%s214] sm:$0x1] %v1453
        %s1457 = sand.u32 %s137, 1
        %s1458 = scalar_lea.sflag [#allocation3], %s1457
        %s1459 = sand.u32 %s137, 1
        %s1460 = scalar_lea.vmem [#allocation2], %s1459
        // Predicated region
        $region41: #{road_classifier_forward.55} parent=39 // pred_check
          %p1461 = pneg %p147
        $region42: #{road_classifier_forward.55} parent=39 // pred_check_branch
          %1463 = sbr.rel (%p1461) target = $region44
        $region43: #{road_classifier_forward.55} parent=39 // pred_region
          %s1465 = ssub.s32 16, 16
          %1466 = vsyncadd %s1458, %s1465
          %s1467 = smul.addr %s19, 16
          %s1468 = scalar_lea.hbm %s5, %s1467
          %s1470 = sshll.u32 %s1460, 4
          %s1471 = int_to_ptr.vmem [resolvable:$true] %s1470
          %1473 = dma.vmem_to_hbm [thread:$0]  %s1471, 16, %s1468, %s1458
        $region44: #{road_classifier_forward.55} parent=39 // pred_fallthru
          _
      $region40: #{road_classifier_forward.55} parent=5 // pred_fallthru
        _
      %p1474 = scmp.le.s32.totalorder 2, %s14
      // Predicated region
      $region45: #{road_classifier_forward.55} parent=5 // pred_check
        %p1475 = pneg %p1474
      $region46: #{road_classifier_forward.55} parent=5 // pred_check_branch
        %1477 = sbr.rel (%p1475) target = $region48
      $region47: #{road_classifier_forward.55} parent=5 // pred_region
        %s1478 = ssub.s32 %s14, 2
        // Predicated region
        $region49: #{road_classifier_forward.55} parent=47 // pred_check
          %p1479 = pneg %p153
        $region50: #{road_classifier_forward.55} parent=47 // pred_check_branch
          %1481 = sbr.rel (%p1479) target = $region52
        $region51: #{road_classifier_forward.55} parent=47 // pred_region
          %s1482 = sand.u32 %s138, 1
          %s1483 = scalar_lea.sflag [#allocation3], %s1482
          %s1484 = sand.u32 %s138, 1
          %s1485 = scalar_lea.vmem [#allocation2], %s1484
          %1486 = dma.done %s1483, 16
        $region52: #{road_classifier_forward.55} parent=47 // pred_fallthru
          _
      $region48: #{road_classifier_forward.55} parent=5 // pred_fallthru
        _
    $region6: #{road_classifier_forward.55} parent=1 // loop_footer
      %s18 = sadd.s32 1, %s14
    $region7: #{road_classifier_forward.55} parent=1 // loop_footer_branch
      %13 = sbr.rel target = $region3
    $region8: #{road_classifier_forward.55} parent=1 // loop_exit
      _
    %1487 = vsyncpa [#allocation3], 1
    %s1488 = scalar_lea.sflag [#allocation3], 1
    %1489 = vsyncpa %s1488, 1

</llo_original>
